<compile_context>
chip_gen: v7x
topology: tpu7x:2x2x1
jax: 0.10.0
libtpu: 0.0.40
codegen_flags: <defaults>
</compile_context>

<pallas_src>
import functools
import math

import jax
import jax.numpy as jnp
import numpy as np
from jax.experimental import pallas as pl
from jax.experimental.pallas import tpu as pltpu

NEG_SLOPE = 0.2                      # nn.LeakyReLU(0.2)
COMPUTE_DTYPE = jnp.bfloat16         # MXU operand / streaming dtype (accumulation is f32)


# ---------------------------------------------------------------------------
# Generation-aware VMEM plan (per-step working-set budget + scoped-VMEM limit)
# ---------------------------------------------------------------------------
def _vmem_plan():
    try:
        cap = int(pltpu.get_tpu_info().vmem_capacity_bytes)   # 128MiB v5e/v6e, 64MiB v7x
    except Exception:                                          # safe fallback (v7x-sized)
        cap = 64 << 20
    limit = min(48 << 20, (cap * 3) // 4)                      # scoped-VMEM limit for Mosaic
    budget = max(8 << 20, min(cap // 3, limit - (8 << 20)))    # per-step footprint budget
    return budget, limit


def _pick_tile(mcomp, wp, cin, cout, out_itemsize, budget):
    """Flat-M tile size: whole image if the (double-buffer-aware) footprint fits,
    else the largest 128-lane multiple that does."""
    in_len = mcomp + 2 * wp + 2                          # flat input length per channel
    fixed = 2 * cin * in_len * 2                         # double-buffered bf16 input block
    per_m = (2 * 4 * cout * 2                            # double-buffered bf16 bias block
             + 2 * 4 * cout * out_itemsize               # double-buffered output block
             + 4 * cin * 2                               # stacked-tap VMEM scratch
             + 4 * cout * 4)                             # f32 accumulator
    if fixed + per_m * mcomp <= budget:
        return mcomp, 1                                  # whole image per grid step
    tile = max(128, ((budget - fixed) // per_m) // 128 * 128)
    return tile, pl.cdiv(mcomp, tile)


# ---------------------------------------------------------------------------
# Fused kernel: ConvTranspose2d(4x4,s2,p1) via parity GEMM + texel bias (+ LeakyReLU)
# ---------------------------------------------------------------------------
def _deconv_parity_kernel(x_ref, w_ref, b_ref, o_ref, s_ref, *,
                          wp, tile_m, cin, n_tiles, apply_act):
    """One (M-tile, batch) grid step.

    x_ref : (Cin, L)          flat edge-padded input, whole image for this batch (bf16)
    w_ref : (4*Cout, 4*Cin)   parity-stacked, weight-norm-folded weight matrix (bf16)
    b_ref : (4*Cout, tile_m)  texel bias, parity-plane flat layout (bf16)
    o_ref : (4*Cout, tile_m)  output parity planes (flat padded-width layout)
    s_ref : (4*Cin, tile_m)   VMEM scratch: the 4 shifted tap views stacked along K
    """
    tap_offsets = (0, 1, wp, wp + 1)                    # (dr, dc) in {0,1}^2
    if n_tiles == 1:                                    # static offsets (common fast path)
        for t, off in enumerate(tap_offsets):
            s_ref[t * cin:(t + 1) * cin, :] = x_ref[:, off:off + tile_m]
    else:                                               # 128-aligned flat M tiles
        base = pl.multiple_of(pl.program_id(0) * tile_m, 128)
        for t, off in enumerate(tap_offsets):
            s_ref[t * cin:(t + 1) * cin, :] = x_ref[:, pl.ds(base + off, tile_m)]

    # Single large-K GEMM serves all 4 output parities; f32 accumulation.
    acc = jnp.dot(w_ref[...], s_ref[...], preferred_element_type=jnp.float32)
    acc = acc + b_ref[...].astype(jnp.float32)
    if apply_act:
        acc = jnp.maximum(acc, NEG_SLOPE * acc)         # LeakyReLU(0.2)
    o_ref[...] = acc.astype(o_ref.dtype)


def deconv_texel_bias(x, p, *, apply_act, out_dtype=COMPUTE_DTYPE):
    """DeconvTexelBias: ConvTranspose2dWN(4x4, s2, p1, bias=False) + texel bias
    (+ LeakyReLU).  x: (B, Cin, Hin, Win) NCHW -> (B, Cout, 2Hin, 2Win) in out_dtype."""
    B, Cin, Hin, Win = x.shape
    w_t, g, bias = p["w"], p["g"], p["bias"]            # w_t: (Cin, Cout, 4, 4)
    Cout = w_t.shape[1]
    Hout, Wout = 2 * Hin, 2 * Win
    Wp = Win + 2                                        # padded flat row width
    Hv = Hin + 1                                        # flat rows the kernel computes over
    Mcomp = Hv * Wp

    # ---- parameter folding (tiny, plain JAX; depends on params only) ----
    w32 = w_t.astype(jnp.float32)
    wnorm = jnp.sqrt(jnp.sum(w32 ** 2))                 # GLOBAL norm, as in ConvTranspose2dWN
    w_eff = w32 * g[None, :, None, None] / wnorm        # (Cin, Cout, 4, 4)
    wq = w_eff.transpose(2, 3, 1, 0)                    # (kh, kw, Cout, Cin)
    sel = np.array([[3, 1], [2, 0]])                    # kh = 3 - py - 2*dr (kw likewise)
    wmat = wq[sel[:, None, :, None], sel[None, :, None, :]]      # (py, px, dr, dc, Cout, Cin)
    wmat = (wmat.transpose(0, 1, 4, 2, 3, 5)
                .reshape(4 * Cout, 4 * Cin).astype(COMPUTE_DTYPE))

    # ---- layout / tile sizing ----
    budget, vmem_limit = _vmem_plan()
    tile_m, n_mt = _pick_tile(Mcomp, Wp, Cin, Cout, jnp.dtype(out_dtype).itemsize, budget)
    Mp = n_mt * tile_m                                  # padded flat output length
    L = Mp + Wp + 2                                     # flat input length the taps may read

    # ---- input: edge-pad by 1 each side, flatten with padded width, zero tail ----
    xp = jnp.pad(x.astype(COMPUTE_DTYPE), ((0, 0), (0, 0), (1, 1), (1, 1)))
    xf = xp.reshape(B, Cin, (Hin + 2) * Wp)
    xf = jnp.pad(xf, ((0, 0), (0, 0), (0, L - (Hin + 2) * Wp)))

    # ---- texel bias, de-interleaved once into the kernel's parity-plane flat layout ----
    # (handles both the full (1,C,Hout,Wout) and the non=True (1,C,1,1) shapes)
    bias_full = jnp.broadcast_to(bias, (1, Cout, Hout, Wout))[0].astype(COMPUTE_DTYPE)
    bdi = bias_full.reshape(Cout, Hin, 2, Win, 2).transpose(2, 4, 0, 1, 3)  # (py,px,C,H,W)
    planes = []
    for py in range(2):
        for px in range(2):
            bp = jnp.pad(bdi[py, px], ((0, 0), (py, Hv - Hin - py), (px, Wp - Win - px)))
            planes.append(bp.reshape(Cout, Mcomp))
    bias_planes = jnp.pad(jnp.concatenate(planes, axis=0), ((0, 0), (0, Mp - Mcomp)))

    kernel = functools.partial(_deconv_parity_kernel, wp=Wp, tile_m=tile_m, cin=Cin,
                               n_tiles=n_mt, apply_act=apply_act)

    # Advisory cost hint: this kernel is bandwidth-bound at these channel counts.
    flops = 2 * B * n_mt * (4 * Cout) * (4 * Cin) * tile_m
    bytes_accessed = (n_mt * xf.size * xf.dtype.itemsize
                      + bias_planes.size * bias_planes.dtype.itemsize
                      + wmat.size * wmat.dtype.itemsize
                      + B * (4 * Cout) * Mp * jnp.dtype(out_dtype).itemsize)

    out_planes = pl.pallas_call(
        kernel,
        out_shape=jax.ShapeDtypeStruct((B, 4 * Cout, Mp), out_dtype),
        grid_spec=pltpu.PrefetchScalarGridSpec(
            num_scalar_prefetch=0,
            grid=(n_mt, B),                  # batch innermost: weight/bias block indices are
            in_specs=[                       # constant across it -> their re-DMA is skipped
                pl.BlockSpec((None, Cin, L), lambda r, b: (b, 0, 0)),
                pl.BlockSpec((4 * Cout, 4 * Cin), lambda r, b: (0, 0)),
                pl.BlockSpec((4 * Cout, tile_m), lambda r, b: (0, r)),
            ],
            out_specs=pl.BlockSpec((None, 4 * Cout, tile_m), lambda r, b: (b, 0, r)),
            scratch_shapes=[pltpu.VMEM((4 * Cin, tile_m), COMPUTE_DTYPE)],
        ),
        compiler_params=pltpu.CompilerParams(
            dimension_semantics=("parallel", "parallel"),   # independent blocks: megacore both
            vmem_limit_bytes=vmem_limit),
        cost_estimate=pl.CostEstimate(flops=flops, transcendentals=0,
                                      bytes_accessed=bytes_accessed),
    )(xf, wmat, bias_planes)

    # ---- parity planes -> NCHW (cheap O(output) XLA pass; fuses with the next layer's
    #      edge-pad / the final cast) ----
    pr = out_planes[:, :, :Mcomp].reshape(B, 2, 2, Cout, Hv, Wp)
    parts = [pr[:, py, px, :, py:py + Hin, px:px + Win]
             for py in range(2) for px in range(2)]
    y = jnp.stack(parts, axis=0).reshape(2, 2, B, Cout, Hin, Win)
    y = y.transpose(2, 3, 4, 0, 5, 1).reshape(B, Cout, Hout, Wout)
    return y.astype(out_dtype)


# ---------------------------------------------------------------------------
# ConvUpsample forward (defaults: res=False, use_bilinear=False, non=False)
# ---------------------------------------------------------------------------
def conv_upsample(params, x, *, no_activ=False):
    # Inter-layer tensor stays bf16 (half the HBM bytes); its interleave fuses with
    # layer 2's edge-pad.  Final layer is emitted in f32.
    h = deconv_texel_bias(x, params["conv1"], apply_act=True, out_dtype=COMPUTE_DTYPE)
    # TODO(synk): res=True branch (Conv2dWN 3x3 residual convs) not ported.
    # TODO(synk): use_bilinear=True branch (F.interpolate x2 + 3x3 Conv2dWN) not ported.
    h = deconv_texel_bias(h, params["conv2"], apply_act=not no_activ,
                          out_dtype=jnp.float32)
    return h


# ---------------------------------------------------------------------------
# Deterministic parameter init mirroring ConvUpsample(cin, chidden, cout, fs)
# ---------------------------------------------------------------------------
def init_params(key, cin, chidden, cout, feature_size):
    def deconv_layer(k, ci, co, out_hw):
        kw_, kg, kb = jax.random.split(k, 3)
        std = math.sqrt(2.0 / ((ci + co) * 16))
        w = std * jax.random.normal(kw_, (ci, co, 4, 4), jnp.float32)
        # PyTorch inits g=1 and bias=0; use g ~ ||w|| and a random texel bias so the
        # weight-norm scaling and bias-add paths are actually exercised by the test.
        g = jnp.sqrt(jnp.sum(w ** 2)) * jax.random.uniform(kg, (co,), jnp.float32, 0.8, 1.2)
        bias = 0.1 * jax.random.normal(kb, (1, co, out_hw, out_hw), jnp.float32)
        return {"w": w, "g": g, "bias": bias}

    k1, k2 = jax.random.split(key)
    return {"conv1": deconv_layer(k1, cin, chidden, 2 * feature_size),
            "conv2": deconv_layer(k2, chidden, cout, 4 * feature_size)}


# ---------------------------------------------------------------------------
# Pure-JAX reference: ConvTranspose2d as the adjoint (VJP) of Conv2d, which is
# exactly PyTorch's definition of F.conv_transpose2d.
# ---------------------------------------------------------------------------
def _reference_forward(params, x, no_activ=False):
    def deconv_ref(h, p):
        w_t, g, bias = p["w"], p["g"], p["bias"]
        wnorm = jnp.sqrt(jnp.sum(w_t ** 2))
        w_eff = w_t * g[None, :, None, None] / wnorm          # (Cin, Cout, 4, 4)
        B, Ci, H, W = h.shape
        Co = w_t.shape[1]

        def fwd_conv(z):                                      # Conv2d(Cout->Cin, 4, s2, p1)
            return jax.lax.conv_general_dilated(
                z, w_eff, window_strides=(2, 2), padding=((1, 1), (1, 1)),
                dimension_numbers=("NCHW", "OIHW", "NCHW"),
                precision=jax.lax.Precision.HIGHEST)

        z0 = jnp.zeros((B, Co, 2 * H, 2 * W), jnp.float32)
        _, vjp_fn = jax.vjp(fwd_conv, z0)
        (y,) = vjp_fn(h)
        return y + jnp.broadcast_to(bias, (1, Co, 2 * H, 2 * W))

    def lrelu(t):
        return jnp.where(t >= 0, t, NEG_SLOPE * t)

    h = lrelu(deconv_ref(x, params["conv1"]))
    h = deconv_ref(h, params["conv2"])
    return h if no_activ else lrelu(h)


# ---------------------------------------------------------------------------
if __name__ == "__main__":
    B, CIN, CHIDDEN, COUT, FEATURE_SIZE = 2, 8, 16, 8, 16   # input spatial = feature_size

    key = jax.random.PRNGKey(0)
    kp, kx = jax.random.split(key)
    params = init_params(kp, CIN, CHIDDEN, COUT, FEATURE_SIZE)
    x = jax.random.normal(kx, (B, CIN, FEATURE_SIZE, FEATURE_SIZE), jnp.float32)

    fwd = jax.jit(conv_upsample)
    out = fwd(params, x)
    jax.block_until_ready(out)

    assert out.shape == (B, COUT, 4 * FEATURE_SIZE, 4 * FEATURE_SIZE)
    assert bool(jnp.all(jnp.isfinite(out)))

    ref = jax.jit(_reference_forward)(params, x)
    np.testing.assert_allclose(np.asarray(out), np.asarray(ref), rtol=3e-2, atol=3e-2)

    print("KERNEL_OK")
</pallas_src>

<mosaic_0001>
module attributes {stable_mosaic.version = 11 : i64} {
  func.func @_deconv_parity_kernel(%arg0: i32, %arg1: i32, %arg2: memref<1x8x326xbf16, #tpu.memory_space<vmem>>, %arg3: memref<64x32xbf16, #tpu.memory_space<vmem>>, %arg4: memref<64x306xbf16, #tpu.memory_space<vmem>>, %arg5: memref<1x64x306xbf16, #tpu.memory_space<vmem>>, %arg6: memref<32x306xbf16, #tpu.memory_space<vmem>>) attributes {dimension_semantics = [#tpu.dimension_semantics<parallel>, #tpu.dimension_semantics<parallel>], iteration_bounds = array<i64: 1, 2>, scalar_prefetch = 0 : i64, scratch_operands = 1 : i64, tpu.core_type = #tpu.core_type<tc>, window_params = [{transform_indices = @transform_0, window_bounds = array<i64: 1, 8, 326>}, {pipeline_mode = #tpu.pipeline_mode<synchronous>, transform_indices = @transform_1, window_bounds = array<i64: 64, 32>}, {transform_indices = @transform_2, window_bounds = array<i64: 64, 306>}, {transform_indices = @transform_3, window_bounds = array<i64: 1, 64, 306>}]} {
    %c0 = arith.constant 0 : index
    %c0_0 = arith.constant 0 : index
    %c0_1 = arith.constant 0 : index
    %0 = vector.load %arg2[%c0, %c0_0, %c0_1] : memref<1x8x326xbf16, #tpu.memory_space<vmem>>, vector<1x8x306xbf16>
    %1 = vector.shape_cast %0 : vector<1x8x306xbf16> to vector<8x306xbf16>
    %c0_2 = arith.constant 0 : index
    %c0_3 = arith.constant 0 : index
    %2 = vector.load %arg6[%c0_2, %c0_3] : memref<32x306xbf16, #tpu.memory_space<vmem>>, vector<8x306xbf16>
    tpu.vector_store %arg6[%c0_2, %c0_3], %1 {strides = array<i32>} : memref<32x306xbf16, #tpu.memory_space<vmem>>, vector<8x306xbf16>,
    %c0_4 = arith.constant 0 : index
    %c0_5 = arith.constant 0 : index
    %c1 = arith.constant 1 : index
    %3 = vector.load %arg2[%c0_4, %c0_5, %c1] : memref<1x8x326xbf16, #tpu.memory_space<vmem>>, vector<1x8x306xbf16>
    %4 = vector.shape_cast %3 : vector<1x8x306xbf16> to vector<8x306xbf16>
    %c8 = arith.constant 8 : index
    %c0_6 = arith.constant 0 : index
    %5 = vector.load %arg6[%c8, %c0_6] : memref<32x306xbf16, #tpu.memory_space<vmem>>, vector<8x306xbf16>
    tpu.vector_store %arg6[%c8, %c0_6], %4 {strides = array<i32>} : memref<32x306xbf16, #tpu.memory_space<vmem>>, vector<8x306xbf16>,
    %c0_7 = arith.constant 0 : index
    %c0_8 = arith.constant 0 : index
    %c18 = arith.constant 18 : index
    %6 = vector.load %arg2[%c0_7, %c0_8, %c18] : memref<1x8x326xbf16, #tpu.memory_space<vmem>>, vector<1x8x306xbf16>
    %7 = vector.shape_cast %6 : vector<1x8x306xbf16> to vector<8x306xbf16>
    %c16 = arith.constant 16 : index
    %c0_9 = arith.constant 0 : index
    %8 = vector.load %arg6[%c16, %c0_9] : memref<32x306xbf16, #tpu.memory_space<vmem>>, vector<8x306xbf16>
    tpu.vector_store %arg6[%c16, %c0_9], %7 {strides = array<i32>} : memref<32x306xbf16, #tpu.memory_space<vmem>>, vector<8x306xbf16>,
    %c0_10 = arith.constant 0 : index
    %c0_11 = arith.constant 0 : index
    %c19 = arith.constant 19 : index
    %9 = vector.load %arg2[%c0_10, %c0_11, %c19] : memref<1x8x326xbf16, #tpu.memory_space<vmem>>, vector<1x8x306xbf16>
    %10 = vector.shape_cast %9 : vector<1x8x306xbf16> to vector<8x306xbf16>
    %c24 = arith.constant 24 : index
    %c0_12 = arith.constant 0 : index
    %11 = vector.load %arg6[%c24, %c0_12] : memref<32x306xbf16, #tpu.memory_space<vmem>>, vector<8x306xbf16>
    tpu.vector_store %arg6[%c24, %c0_12], %10 {strides = array<i32>} : memref<32x306xbf16, #tpu.memory_space<vmem>>, vector<8x306xbf16>,
    %c0_13 = arith.constant 0 : index
    %c0_14 = arith.constant 0 : index
    %12 = vector.load %arg3[%c0_13, %c0_14] : memref<64x32xbf16, #tpu.memory_space<vmem>>, vector<64x32xbf16>
    %c0_15 = arith.constant 0 : index
    %c0_16 = arith.constant 0 : index
    %13 = vector.load %arg6[%c0_15, %c0_16] : memref<32x306xbf16, #tpu.memory_space<vmem>>, vector<32x306xbf16>
    %cst = arith.constant dense<0.000000e+00> : vector<64x306xf32>
    %14 = tpu.matmul %12, %13, %cst {dimension_numbers = #tpu.dot_dimension_numbers<[1], [0], [0], [1], [0, 0, 1, 1], [], []>} : vector<64x32xbf16>, vector<32x306xbf16>, vector<64x306xf32> -> vector<64x306xf32>
    %c0_17 = arith.constant 0 : index
    %c0_18 = arith.constant 0 : index
    %15 = vector.load %arg4[%c0_17, %c0_18] : memref<64x306xbf16, #tpu.memory_space<vmem>>, vector<64x306xbf16>
    %16 = arith.extf %15 : vector<64x306xbf16> to vector<64x306xf32>
    %17 = arith.addf %14, %16 : vector<64x306xf32>
    %cst_19 = arith.constant 2.000000e-01 : f32
    %18 = vector.broadcast %cst_19 : f32 to vector<64x306xf32>
    %19 = arith.mulf %18, %17 : vector<64x306xf32>
    %20 = arith.maximumf %17, %19 : vector<64x306xf32>
    %21 = arith.truncf %20 : vector<64x306xf32> to vector<64x306xbf16>
    %c0_20 = arith.constant 0 : index
    %c0_21 = arith.constant 0 : index
    %c0_22 = arith.constant 0 : index
    %22 = vector.load %arg5[%c0_20, %c0_21, %c0_22] : memref<1x64x306xbf16, #tpu.memory_space<vmem>>, vector<1x64x306xbf16>
    %23 = vector.shape_cast %22 : vector<1x64x306xbf16> to vector<64x306xbf16>
    %24 = vector.shape_cast %21 : vector<64x306xbf16> to vector<1x64x306xbf16>
    tpu.vector_store %arg5[%c0_20, %c0_21, %c0_22], %24 {strides = array<i32>} : memref<1x64x306xbf16, #tpu.memory_space<vmem>>, vector<1x64x306xbf16>,
    return
  }
  func.func @transform_0(%arg0: i32, %arg1: i32) -> (i32, i32, i32) {
    %c0_i32 = arith.constant 0 : i32
    %c0_i32_0 = arith.constant 0 : i32
    %c0_i32_1 = arith.constant 0 : i32
    return %arg1, %c0_i32, %c0_i32_0 : i32, i32, i32
  }
  func.func @transform_1(%arg0: i32, %arg1: i32) -> (i32, i32) {
    %c0_i32 = arith.constant 0 : i32
    %c0_i32_0 = arith.constant 0 : i32
    %c0_i32_1 = arith.constant 0 : i32
    return %c0_i32, %c0_i32_0 : i32, i32
  }
  func.func @transform_2(%arg0: i32, %arg1: i32) -> (i32, i32) {
    %c0_i32 = arith.constant 0 : i32
    %c0_i32_0 = arith.constant 0 : i32
    return %c0_i32, %arg0 : i32, i32
  }
  func.func @transform_3(%arg0: i32, %arg1: i32) -> (i32, i32, i32) {
    %c0_i32 = arith.constant 0 : i32
    %c0_i32_0 = arith.constant 0 : i32
    return %arg1, %c0_i32, %arg0 : i32, i32, i32
  }
}

module attributes {stable_mosaic.version = 11 : i64} {
  func.func @_deconv_parity_kernel(%arg0: i32, %arg1: i32, %arg2: memref<1x16x1158xbf16, #tpu.memory_space<vmem>>, %arg3: memref<32x64xbf16, #tpu.memory_space<vmem>>, %arg4: memref<32x1122xbf16, #tpu.memory_space<vmem>>, %arg5: memref<1x32x1122xf32, #tpu.memory_space<vmem>>, %arg6: memref<64x1122xbf16, #tpu.memory_space<vmem>>) attributes {dimension_semantics = [#tpu.dimension_semantics<parallel>, #tpu.dimension_semantics<parallel>], iteration_bounds = array<i64: 1, 2>, scalar_prefetch = 0 : i64, scratch_operands = 1 : i64, tpu.core_type = #tpu.core_type<tc>, window_params = [{transform_indices = @transform_0, window_bounds = array<i64: 1, 16, 1158>}, {pipeline_mode = #tpu.pipeline_mode<synchronous>, transform_indices = @transform_1, window_bounds = array<i64: 32, 64>}, {transform_indices = @transform_2, window_bounds = array<i64: 32, 1122>}, {transform_indices = @transform_3, window_bounds = array<i64: 1, 32, 1122>}]} {
    %c0 = arith.constant 0 : index
    %c0_0 = arith.constant 0 : index
    %c0_1 = arith.constant 0 : index
    %0 = vector.load %arg2[%c0, %c0_0, %c0_1] : memref<1x16x1158xbf16, #tpu.memory_space<vmem>>, vector<1x16x1122xbf16>
    %1 = vector.shape_cast %0 : vector<1x16x1122xbf16> to vector<16x1122xbf16>
    %c0_2 = arith.constant 0 : index
    %c0_3 = arith.constant 0 : index
    %2 = vector.load %arg6[%c0_2, %c0_3] : memref<64x1122xbf16, #tpu.memory_space<vmem>>, vector<16x1122xbf16>
    tpu.vector_store %arg6[%c0_2, %c0_3], %1 {strides = array<i32>} : memref<64x1122xbf16, #tpu.memory_space<vmem>>, vector<16x1122xbf16>,
    %c0_4 = arith.constant 0 : index
    %c0_5 = arith.constant 0 : index
    %c1 = arith.constant 1 : index
    %3 = vector.load %arg2[%c0_4, %c0_5, %c1] : memref<1x16x1158xbf16, #tpu.memory_space<vmem>>, vector<1x16x1122xbf16>
    %4 = vector.shape_cast %3 : vector<1x16x1122xbf16> to vector<16x1122xbf16>
    %c16 = arith.constant 16 : index
    %c0_6 = arith.constant 0 : index
    %5 = vector.load %arg6[%c16, %c0_6] : memref<64x1122xbf16, #tpu.memory_space<vmem>>, vector<16x1122xbf16>
    tpu.vector_store %arg6[%c16, %c0_6], %4 {strides = array<i32>} : memref<64x1122xbf16, #tpu.memory_space<vmem>>, vector<16x1122xbf16>,
    %c0_7 = arith.constant 0 : index
    %c0_8 = arith.constant 0 : index
    %c34 = arith.constant 34 : index
    %6 = vector.load %arg2[%c0_7, %c0_8, %c34] : memref<1x16x1158xbf16, #tpu.memory_space<vmem>>, vector<1x16x1122xbf16>
    %7 = vector.shape_cast %6 : vector<1x16x1122xbf16> to vector<16x1122xbf16>
    %c32 = arith.constant 32 : index
    %c0_9 = arith.constant 0 : index
    %8 = vector.load %arg6[%c32, %c0_9] : memref<64x1122xbf16, #tpu.memory_space<vmem>>, vector<16x1122xbf16>
    tpu.vector_store %arg6[%c32, %c0_9], %7 {strides = array<i32>} : memref<64x1122xbf16, #tpu.memory_space<vmem>>, vector<16x1122xbf16>,
    %c0_10 = arith.constant 0 : index
    %c0_11 = arith.constant 0 : index
    %c35 = arith.constant 35 : index
    %9 = vector.load %arg2[%c0_10, %c0_11, %c35] : memref<1x16x1158xbf16, #tpu.memory_space<vmem>>, vector<1x16x1122xbf16>
    %10 = vector.shape_cast %9 : vector<1x16x1122xbf16> to vector<16x1122xbf16>
    %c48 = arith.constant 48 : index
    %c0_12 = arith.constant 0 : index
    %11 = vector.load %arg6[%c48, %c0_12] : memref<64x1122xbf16, #tpu.memory_space<vmem>>, vector<16x1122xbf16>
    tpu.vector_store %arg6[%c48, %c0_12], %10 {strides = array<i32>} : memref<64x1122xbf16, #tpu.memory_space<vmem>>, vector<16x1122xbf16>,
    %c0_13 = arith.constant 0 : index
    %c0_14 = arith.constant 0 : index
    %12 = vector.load %arg3[%c0_13, %c0_14] : memref<32x64xbf16, #tpu.memory_space<vmem>>, vector<32x64xbf16>
    %c0_15 = arith.constant 0 : index
    %c0_16 = arith.constant 0 : index
    %13 = vector.load %arg6[%c0_15, %c0_16] : memref<64x1122xbf16, #tpu.memory_space<vmem>>, vector<64x1122xbf16>
    %cst = arith.constant dense<0.000000e+00> : vector<32x1122xf32>
    %14 = tpu.matmul %12, %13, %cst {dimension_numbers = #tpu.dot_dimension_numbers<[1], [0], [0], [1], [0, 0, 1, 1], [], []>} : vector<32x64xbf16>, vector<64x1122xbf16>, vector<32x1122xf32> -> vector<32x1122xf32>
    %c0_17 = arith.constant 0 : index
    %c0_18 = arith.constant 0 : index
    %15 = vector.load %arg4[%c0_17, %c0_18] : memref<32x1122xbf16, #tpu.memory_space<vmem>>, vector<32x1122xbf16>
    %16 = arith.extf %15 : vector<32x1122xbf16> to vector<32x1122xf32>
    %17 = arith.addf %14, %16 : vector<32x1122xf32>
    %cst_19 = arith.constant 2.000000e-01 : f32
    %18 = vector.broadcast %cst_19 : f32 to vector<32x1122xf32>
    %19 = arith.mulf %18, %17 : vector<32x1122xf32>
    %20 = arith.maximumf %17, %19 : vector<32x1122xf32>
    %c0_20 = arith.constant 0 : index
    %c0_21 = arith.constant 0 : index
    %c0_22 = arith.constant 0 : index
    %21 = vector.load %arg5[%c0_20, %c0_21, %c0_22] : memref<1x32x1122xf32, #tpu.memory_space<vmem>>, vector<1x32x1122xf32>
    %22 = vector.shape_cast %21 : vector<1x32x1122xf32> to vector<32x1122xf32>
    %23 = vector.shape_cast %20 : vector<32x1122xf32> to vector<1x32x1122xf32>
    tpu.vector_store %arg5[%c0_20, %c0_21, %c0_22], %23 {strides = array<i32>} : memref<1x32x1122xf32, #tpu.memory_space<vmem>>, vector<1x32x1122xf32>,
    return
  }
  func.func @transform_0(%arg0: i32, %arg1: i32) -> (i32, i32, i32) {
    %c0_i32 = arith.constant 0 : i32
    %c0_i32_0 = arith.constant 0 : i32
    %c0_i32_1 = arith.constant 0 : i32
    return %arg1, %c0_i32, %c0_i32_0 : i32, i32, i32
  }
  func.func @transform_1(%arg0: i32, %arg1: i32) -> (i32, i32) {
    %c0_i32 = arith.constant 0 : i32
    %c0_i32_0 = arith.constant 0 : i32
    %c0_i32_1 = arith.constant 0 : i32
    return %c0_i32, %c0_i32_0 : i32, i32
  }
  func.func @transform_2(%arg0: i32, %arg1: i32) -> (i32, i32) {
    %c0_i32 = arith.constant 0 : i32
    %c0_i32_0 = arith.constant 0 : i32
    return %c0_i32, %arg0 : i32, i32
  }
  func.func @transform_3(%arg0: i32, %arg1: i32) -> (i32, i32, i32) {
    %c0_i32 = arith.constant 0 : i32
    %c0_i32_0 = arith.constant 0 : i32
    return %arg1, %c0_i32, %arg0 : i32, i32, i32
  }
}

</mosaic_0001>

<llo_original>
// kernel: conv_upsample.2
$region0: #{conv_upsample.2}
  #allocation0 [shape = 'u32[]', space=smem, size = 0x4, offset = 0x4, fixed_abs, tag = 'smem constant byte address 0x4 - core index']
  #allocation1 [shape = 'u32[144,128]{1,0:T(1,128)}', space=vmem, size = 0x12000, scoped, tag = 'internal scratch']
  #allocation2 [shape = 'bf16[32,306]{1,0:T(16,128)(2,1)}', space=vmem, size = 0x6000, scoped, tag = 'scratch operand']
  %s0 = inlined_call_operand.vmem [shape: bf16[2,8,326], index: 0, kind: input, shape index: {}]
  %s1 = inlined_call_operand.vmem [shape: bf16[64,32], index: 1, kind: input, shape index: {}]
  %s2 = inlined_call_operand.vmem [shape: bf16[64,306], index: 2, kind: input, shape index: {}]
  %s3 = inlined_call_operand.vmem [shape: bf16[2,64,306], index: 3, kind: output, shape index: {}]
  %s4 = sld [smem:[#allocation0]]
  $region45: #{conv_upsample.2} parent=0
    _
  %s6 = ssub.s32 1, %s4
  %s7 = scalar_select 0, %s6, %s4
  loop: start=0, step=1, limit=4
  $region2: #{conv_upsample.2} parent=0 // loop_pre_header
    _
  $region3: #{conv_upsample.2} parent=0 // loop_header
    %s9 = sphi 0, %s13
    %p10 = scmp.ge.s32.totalorder %s9, 4
    %s16 = sphi 0, %s28
    %s17 = sphi 0, %s24
    %s18 = sphi 0, %s16
    %s19 = sphi 0, %s17
    %s20 = sphi 0, %s18
    %s21 = sphi 0, %s19
    %s31 = sphi 0, %s33
    %s34 = sphi 0, %s31
    %s35 = sphi 0, %s34
    %s51 = sphi 0, %s35
    %s55 = sphi 0, %s55
    %s57 = sphi 0, %s55
    %s58 = sphi 0, %s57
    %s72 = sphi 0, %s58
    %s78 = sphi 0, %s80
    %s81 = sphi 0, %s78
    %s82 = sphi 0, %s81
    %s98 = sphi 0, %s82
    %s106 = sphi 0, %s108
    %s109 = sphi 0, %s106
    %s110 = sphi 0, %s109
    %s126 = sphi 0, %s110
  $region4: #{conv_upsample.2} parent=0 // loop_header_branch
    %12 = sbr.rel (%p10) target = $region8
  $region5: #{conv_upsample.2} parent=0 // loop_body
    %s14 = ssub.s32 %s9, 1
    %s15 = ssub.s32 %s9, 2
    %s22 = sadd.s32 1, %s17
    %p23 = scmp.ge.s32.totalorder %s22, 2
    %s24 = scalar_select %p23, 0, %s22
    %s25 = sadd.s32 1, %s16
    %s26 = scalar_select %p23, %s25, %s16
    %p27 = scmp.ge.s32.totalorder %s26, 1
    %s28 = scalar_select %p27, 0, %s26
    %s29 = ssub.s32 %s17, %s24
    %p30 = scmp.eq.s32.totalorder %s29, 0
    %s32 = sadd.s32 %s31, 1
    %s33 = scalar_select %p30, %s31, %s32
    %p36 = pneg %p30
    %p37 = scmp.eq.s32.totalorder %s9, 1
    %p38 = por %p36, %p37
    %p39 = scmp.ne.s32.totalorder %s31, %s34
    %p40 = scmp.eq.s32.totalorder %s9, 0
    %p41 = por %p39, %p40
    %p42 = scmp.ne.s32.totalorder %s31, %s34
    %p43 = scmp.eq.s32.totalorder %s14, 1
    %p44 = por %p42, %p43
    %p45 = scmp.ne.s32.totalorder %s34, %s35
    %p46 = scmp.eq.s32.totalorder %s14, 0
    %p47 = por %p45, %p46
    %p48 = scmp.ne.s32.totalorder %s34, %s35
    %p49 = scmp.eq.s32.totalorder %s15, 1
    %p50 = por %p48, %p49
    %p52 = scmp.ne.s32.totalorder %s35, %s51
    %p53 = scmp.eq.s32.totalorder %s15, 0
    %p54 = por %p52, %p53
    %s56 = sadd.s32 %s55, 1
    %p59 = scmp.eq.s32.totalorder %s9, 1
    %p60 = scmp.ne.s32.totalorder %s55, %s57
    %p61 = scmp.eq.s32.totalorder %s9, 0
    %p62 = por %p60, %p61
    %p63 = scmp.ne.s32.totalorder %s55, %s57
    %p64 = scmp.eq.s32.totalorder %s14, 1
    %p65 = por %p63, %p64
    %p66 = scmp.ne.s32.totalorder %s57, %s58
    %p67 = scmp.eq.s32.totalorder %s14, 0
    %p68 = por %p66, %p67
    %p69 = scmp.ne.s32.totalorder %s57, %s58
    %p70 = scmp.eq.s32.totalorder %s15, 1
    %p71 = por %p69, %p70
    %p73 = scmp.ne.s32.totalorder %s58, %s72
    %p74 = scmp.eq.s32.totalorder %s15, 0
    %p75 = por %p73, %p74
    %s76 = ssub.s32 %s16, %s28
    %p77 = scmp.eq.s32.totalorder %s76, 0
    %s79 = sadd.s32 %s78, 1
    %s80 = scalar_select %p77, %s78, %s79
    %p83 = pneg %p77
    %p84 = scmp.eq.s32.totalorder %s9, 1
    %p85 = por %p83, %p84
    %p86 = scmp.ne.s32.totalorder %s78, %s81
    %p87 = scmp.eq.s32.totalorder %s9, 0
    %p88 = por %p86, %p87
    %p89 = scmp.ne.s32.totalorder %s78, %s81
    %p90 = scmp.eq.s32.totalorder %s14, 1
    %p91 = por %p89, %p90
    %p92 = scmp.ne.s32.totalorder %s81, %s82
    %p93 = scmp.eq.s32.totalorder %s14, 0
    %p94 = por %p92, %p93
    %p95 = scmp.ne.s32.totalorder %s81, %s82
    %p96 = scmp.eq.s32.totalorder %s15, 1
    %p97 = por %p95, %p96
    %p99 = scmp.ne.s32.totalorder %s82, %s98
    %p100 = scmp.eq.s32.totalorder %s15, 0
    %p101 = por %p99, %p100
    %s102 = ssub.s32 %s17, %s24
    %s103 = ssub.s32 %s16, %s28
    %s104 = sor.u32 %s102, %s103
    %p105 = scmp.eq.s32.totalorder %s104, 0
    %s107 = sadd.s32 %s106, 1
    %s108 = scalar_select %p105, %s106, %s107
    %p111 = pneg %p105
    %p112 = scmp.eq.s32.totalorder %s9, 1
    %p113 = por %p111, %p112
    %p114 = scmp.ne.s32.totalorder %s106, %s109
    %p115 = scmp.eq.s32.totalorder %s9, 0
    %p116 = por %p114, %p115
    %p117 = scmp.ne.s32.totalorder %s106, %s109
    %p118 = scmp.eq.s32.totalorder %s14, 1
    %p119 = por %p117, %p118
    %p120 = scmp.ne.s32.totalorder %s109, %s110
    %p121 = scmp.eq.s32.totalorder %s14, 0
    %p122 = por %p120, %p121
    %p123 = scmp.ne.s32.totalorder %s109, %s110
    %p124 = scmp.eq.s32.totalorder %s15, 1
    %p125 = por %p123, %p124
    %p127 = scmp.ne.s32.totalorder %s110, %s126
    %p128 = scmp.eq.s32.totalorder %s15, 0
    %p129 = por %p127, %p128
    %p130 = scmp.le.s32.totalorder 1, %s9
    %p131 = scmp.lt.s32.totalorder %s9, 3
    %p132 = pnand %p130, %p131
    %p133 = pneg %p132
    // Predicated region
    $region9: #{conv_upsample.2} parent=5 // pred_check
      _
    $region10: #{conv_upsample.2} parent=5 // pred_check_branch
      %135 = sbr.rel (%p132) target = $region12
    $region11: #{conv_upsample.2} parent=5 // pred_region
      %s136 = ssub.s32 %s9, 1
      // Predicated region
      $region13: #{conv_upsample.2} parent=11 // pred_check
        %p137 = pneg %p68
      $region14: #{conv_upsample.2} parent=11 // pred_check_branch
        %139 = sbr.rel (%p137) target = $region16
      $region15: #{conv_upsample.2} parent=11 // pred_region
        _
      $region16: #{conv_upsample.2} parent=11 // pred_fallthru
        _
      // Predicated region
      $region17: #{conv_upsample.2} parent=11 // pred_check
        %p140 = pneg %p94
      $region18: #{conv_upsample.2} parent=11 // pred_check_branch
        %142 = sbr.rel (%p140) target = $region20
      $region19: #{conv_upsample.2} parent=11 // pred_region
        %s143 = smul.u32 3, %s18
        %p144 = scmp.lt.s32.totalorder %s143, 2
        %s145 = scalar_select %p144, %s143, 2
        %s146 = smul.addr %s145, 4
        %s147 = scalar_lea.vmem %s2, %s146
        %s148 = smul.u32 3, %s18
      $region20: #{conv_upsample.2} parent=11 // pred_fallthru
        _
    $region12: #{conv_upsample.2} parent=5 // pred_fallthru
      _
    %p149 = scmp.lt.s32.totalorder %s9, 2
    // Predicated region
    $region21: #{conv_upsample.2} parent=5 // pred_check
      %p150 = pneg %p149
    $region22: #{conv_upsample.2} parent=5 // pred_check_branch
      %152 = sbr.rel (%p150) target = $region24
    $region23: #{conv_upsample.2} parent=5 // pred_region
      // Predicated region
      $region25: #{conv_upsample.2} parent=23 // pred_check
        %p153 = pneg %p41
      $region26: #{conv_upsample.2} parent=23 // pred_check_branch
        %155 = sbr.rel (%p153) target = $region28
      $region27: #{conv_upsample.2} parent=23 // pred_region
        %p156 = scmp.lt.s32.totalorder %s17, 1
        %s157 = scalar_select %p156, %s17, 1
        %s158 = smul.addr %s157, 3
        %s159 = smul.addr %s158, 4
        %s160 = scalar_lea.vmem %s0, %s159
      $region28: #{conv_upsample.2} parent=23 // pred_fallthru
        _
    $region24: #{conv_upsample.2} parent=5 // pred_fallthru
      _
    %p161 = scmp.le.s32.totalorder 1, %s9
    %p162 = scmp.lt.s32.totalorder %s9, 3
    %p163 = pnand %p161, %p162
    %p164 = pneg %p163
    // Predicated region
    $region29: #{conv_upsample.2} parent=5 // pred_check
      _
    $region30: #{conv_upsample.2} parent=5 // pred_check_branch
      %166 = sbr.rel (%p163) target = $region32
    $region31: #{conv_upsample.2} parent=5 // pred_region
      %s167 = ssub.s32 %s9, 1
      %p168 = scmp.lt.s32.totalorder %s19, 1
      %s169 = scalar_select %p168, %s19, 1
      %s170 = smul.addr %s169, 3
      %s171 = smul.addr %s170, 4
      %s172 = scalar_lea.vmem %s0, %s171
      %p173 = pneg %p47
      %p174 = pneg %p44
      %p175 = pneg %p68
      %p176 = pneg %p65
      %s177 = smul.u32 3, %s18
      %p178 = scmp.lt.s32.totalorder %s177, 2
      %s179 = scalar_select %p178, %s177, 2
      %s180 = smul.addr %s179, 4
      %s181 = scalar_lea.vmem %s2, %s180
      %p182 = pneg %p94
      %p183 = pneg %p91
      %p184 = pneg %p122
      %p185 = pneg %p119
      %s186 = smul.u32 3, %s18
      %p187 = scmp.lt.s32.totalorder %s19, 1
      %s188 = scalar_select %p187, %s19, 1
      %p189 = scmp.lt.s32.totalorder %s186, 2
      %s190 = scalar_select %p189, %s186, 2
      %s191 = smul.addr %s188, 24
      %s192 = sadd.s32 %s190, %s191
      %s193 = smul.addr %s192, 4
      %s194 = scalar_lea.vmem %s3, %s193
      %p195 = scmp.lt.s32.totalorder %s19, 1
      %s196 = scalar_select %p195, %s19, 1
      %s197 = smul.addr %s196, 3
      %s198 = smul.addr %s197, 4
      %s199 = scalar_lea.vmem %s0, %s198
      %s200 = smul.u32 3, %s18
      %p201 = scmp.lt.s32.totalorder %s200, 2
      %s202 = scalar_select %p201, %s200, 2
      %s203 = smul.addr %s202, 4
      %s204 = scalar_lea.vmem %s2, %s203
      %s205 = smul.u32 3, %s18
      %s206 = smul.u32 3, %s18
      %p207 = scmp.lt.s32.totalorder %s19, 1
      %s208 = scalar_select %p207, %s19, 1
      %p209 = scmp.lt.s32.totalorder %s206, 2
      %s210 = scalar_select %p209, %s206, 2
      %s211 = smul.addr %s208, 24
      %s212 = sadd.s32 %s210, %s211
      %s213 = smul.addr %s212, 4
      %s214 = scalar_lea.vmem %s3, %s213
      %s215 = smul.u32 3, %s18
      %v217 = vld [vmem:[%s199] sm:$0xff]
      %v218 = vld [vmem:[%s199 + $0x8] sm:$0xf]
      %v221 = vunpack.c.l.b16 %v217
      %v222 = vunpack.c.h.b16 %v217
      %v223 = vunpack.c.l.b16 %v218
      %v224 = vpack.c.b16 %v221, %v221
      %v225 = vpack.c.b16 %v222, %v222
      %v226 = vpack.c.b16 %v223, %v223
      %230 = vst [vmem:[#allocation2] sm:$0xf] %v224
      %231 = vst [vmem:[#allocation2 + $0x8] sm:$0xf] %v225
      %vm232 = vcmask 404480
      %233 = vst.msk [vmem:[#allocation2 + $0x10] sm:$0xf] %vm232, %v226
      %v234 = vld [vmem:[%s199] sm:$0xff]
      %v235 = vld [vmem:[%s199 + $0x8] sm:$0xf]
      %v238 = vunpack.c.l.b16 %v234
      %v239 = vunpack.c.h.b16 %v234
      %v240 = vunpack.c.l.b16 %v235
      %v241 = vpack.c.b16 %v238, %v238
      %v242 = vpack.c.b16 %v239, %v239
      %v243 = vpack.c.b16 %v240, %v240
      %244 = vrot.lane.b32.xlu0 %v241, 127
      %v245 = vpop.permute.xlu0 %244
      %246 = vrot.lane.b32.xlu0 %v242, 127
      %v247 = vpop.permute.xlu0 %246
      %248 = vrot.lane.b32.xlu0 %v243, 127
      %v249 = vpop.permute.xlu0 %248
      %vm250 = vcmask 1039360
      %v251 = vsel %vm250, %v245, %v247
      %v252 = vsel %vm250, %v247, %v249
      %256 = vst [vmem:[#allocation2] sm:$0xf0] %v251
      %257 = vst [vmem:[#allocation2 + $0x8] sm:$0xf0] %v252
      %vm258 = vcmask 408580
      %259 = vst.msk [vmem:[#allocation2 + $0x10] sm:$0xf0] %vm258, %v249
      %v260 = vld [vmem:[%s199] sm:$0xff]
      %v261 = vld [vmem:[%s199 + $0x8] sm:$0xf]
      %v264 = vunpack.c.l.b16 %v260
      %v265 = vunpack.c.h.b16 %v260
      %v266 = vunpack.c.l.b16 %v261
      %v267 = vpack.c.b16 %v264, %v264
      %v268 = vpack.c.b16 %v265, %v265
      %v269 = vpack.c.b16 %v266, %v266
      %270 = vrot.lane.b32.xlu0 %v267, 110
      %v271 = vpop.permute.xlu0 %270
      %272 = vrot.lane.b32.xlu0 %v268, 110
      %v273 = vpop.permute.xlu0 %272
      %274 = vrot.lane.b32.xlu0 %v269, 110
      %v275 = vpop.permute.xlu0 %274
      %vm276 = vcmask 900096
      %v277 = vsel %vm276, %v271, %v273
      %v278 = vsel %vm276, %v273, %v275
      %282 = vst [vmem:[#allocation2 + $0x18] sm:$0xf] %v277
      %283 = vst [vmem:[#allocation2 + $0x20] sm:$0xf] %v278
      %284 = vst.msk [vmem:[#allocation2 + $0x28] sm:$0xf] %vm232, %v275
      %v285 = vld [vmem:[%s199] sm:$0xff]
      %v286 = vld [vmem:[%s199 + $0x8] sm:$0xf]
      %v289 = vunpack.c.l.b16 %v285
      %v290 = vunpack.c.h.b16 %v285
      %v291 = vunpack.c.l.b16 %v286
      %v292 = vpack.c.b16 %v289, %v289
      %v293 = vpack.c.b16 %v290, %v290
      %v294 = vpack.c.b16 %v291, %v291
      %295 = vrot.lane.b32.xlu0 %v292, 109
      %v296 = vpop.permute.xlu0 %295
      %297 = vrot.lane.b32.xlu0 %v293, 109
      %v298 = vpop.permute.xlu0 %297
      %299 = vrot.lane.b32.xlu0 %v294, 109
      %v300 = vpop.permute.xlu0 %299
      %vm301 = vcmask 891904
      %v302 = vsel %vm301, %v296, %v298
      %v303 = vsel %vm301, %v298, %v300
      %307 = vst [vmem:[#allocation2 + $0x18] sm:$0xf0] %v302
      %308 = vst [vmem:[#allocation2 + $0x20] sm:$0xf0] %v303
      %309 = vst.msk [vmem:[#allocation2 + $0x28] sm:$0xf0] %vm258, %v300
      %v310 = vld [vmem:[%s1] sm:$0xf]
      %v311 = vld [vmem:[%s1 + $0x4] sm:$0xf]
      %v312 = vld [vmem:[%s1 + $0x8] sm:$0xf]
      %v313 = vld [vmem:[%s1 + $0xc] sm:$0xf]
      %v314 = vld [vmem:[%s1 + $0x10] sm:$0xf]
      %v315 = vld [vmem:[%s1 + $0x14] sm:$0xf]
      %v316 = vld [vmem:[%s1 + $0x18] sm:$0xf]
      %v317 = vld [vmem:[%s1 + $0x1c] sm:$0xf]
      %v318 = vld [vmem:[#allocation2] sm:$0xff]
      %v319 = vld [vmem:[#allocation2 + $0x8] sm:$0xff]
      %v320 = vld [vmem:[#allocation2 + $0x10] sm:$0xff]
      %v321 = vld [vmem:[#allocation2 + $0x18] sm:$0xff]
      %v322 = vld [vmem:[#allocation2 + $0x20] sm:$0xff]
      %v323 = vld [vmem:[#allocation2 + $0x28] sm:$0xff]
      %v324 = vld [vmem:[%s204] sm:$0xff]
      %v325 = vld [vmem:[%s204 + $0x8] sm:$0xf]
      %v326 = vld [vmem:[%s204 + $0xc] sm:$0xff]
      %v327 = vld [vmem:[%s204 + $0x14] sm:$0xf]
      %v328 = vld [vmem:[%s204 + $0x18] sm:$0xff]
      %v329 = vld [vmem:[%s204 + $0x20] sm:$0xf]
      %v330 = vld [vmem:[%s204 + $0x24] sm:$0xff]
      %v331 = vld [vmem:[%s204 + $0x2c] sm:$0xf]
      %v332 = vld [vmem:[%s204 + $0x30] sm:$0xff]
      %v333 = vld [vmem:[%s204 + $0x38] sm:$0xf]
      %v334 = vld [vmem:[%s204 + $0x3c] sm:$0xff]
      %v335 = vld [vmem:[%s204 + $0x44] sm:$0xf]
      %v336 = vld [vmem:[%s204 + $0x48] sm:$0xff]
      %v337 = vld [vmem:[%s204 + $0x50] sm:$0xf]
      %v338 = vld [vmem:[%s204 + $0x54] sm:$0xff]
      %v339 = vld [vmem:[%s204 + $0x5c] sm:$0xf]
      %v340 = vunpack.c.l.bf16 %v324
      %v341 = vunpack.c.h.bf16 %v324
      %v342 = vunpack.c.l.bf16 %v325
      %v343 = vunpack.c.l.bf16 %v326
      %v344 = vunpack.c.h.bf16 %v326
      %v345 = vunpack.c.l.bf16 %v327
      %v346 = vunpack.c.l.bf16 %v328
      %v347 = vunpack.c.h.bf16 %v328
      %v348 = vunpack.c.l.bf16 %v329
      %v349 = vunpack.c.l.bf16 %v330
      %v350 = vunpack.c.h.bf16 %v330
      %v351 = vunpack.c.l.bf16 %v331
      %v352 = vunpack.c.l.bf16 %v332
      %v353 = vunpack.c.h.bf16 %v332
      %v354 = vunpack.c.l.bf16 %v333
      %v355 = vunpack.c.l.bf16 %v334
      %v356 = vunpack.c.h.bf16 %v334
      %v357 = vunpack.c.l.bf16 %v335
      %v358 = vunpack.c.l.bf16 %v336
      %v359 = vunpack.c.h.bf16 %v336
      %v360 = vunpack.c.l.bf16 %v337
      %v361 = vunpack.c.l.bf16 %v338
      %v362 = vunpack.c.h.bf16 %v338
      %v363 = vunpack.c.l.bf16 %v339
      %v372 = vunpack.c.l.b16 %v310
      %v373 = vunpack.c.l.b16 %v311
      %v374 = vunpack.c.l.b16 %v312
      %v375 = vunpack.c.l.b16 %v313
      %v376 = vunpack.c.l.b16 %v314
      %v377 = vunpack.c.l.b16 %v315
      %v378 = vunpack.c.l.b16 %v316
      %v379 = vunpack.c.l.b16 %v317
      %v380 = vpack.c.b16 %v373, %v372
      %v381 = vpack.c.b16 %v375, %v374
      %v382 = vpack.c.b16 %v377, %v376
      %v383 = vpack.c.b16 %v379, %v378
      %vm384 = vcmask 261120
      %v386 = vsel %vm384, %v380, 0
      %v389 = vsel %vm384, %v381, 0
      %v392 = vsel %vm384, %v382, 0
      %v395 = vsel %vm384, %v383, 0
      %397 = vmatprep.subr.bf16.mxu0 %v319
      %398 = vmatpush1.bf16.msra.mxu0 %v318
      %399 = vmatprep.subr.bf16.mxu0 %v322
      %400 = vmatpush1.bf16.msra.mxu0 %v321
      %401 = vmatprep.subr.bf16.mxu0 0
      %402 = vmatpush1.bf16.msra.mxu0 0
      %403 = vmatprep.subr.bf16.mxu0 0
      %404 = vmatpush1.bf16.msra.mxu0 0
      %405 = vmatprep.subr.bf16.mxu0 0
      %406 = vmatpush1.bf16.msra.mxu0 0
      %407 = vmatprep.subr.bf16.mxu0 0
      %408 = vmatpush1.bf16.msra.mxu0 0
      %409 = vmatprep.subr.bf16.mxu0 0
      %410 = vmatpush1.bf16.msra.mxu0 0
      %411 = vmatprep.subr.bf16.mxu0 0
      %412 = vmatpush1.bf16.msra.mxu0 0
      %413 = vmatprep.subr.bf16.mxu0 0
      %414 = vmatpush1.bf16.msra.mxu0 0
      %415 = vmatprep.subr.bf16.mxu0 0
      %416 = vmatpush1.bf16.msra.mxu0 0
      %417 = vmatprep.subr.bf16.mxu0 0
      %418 = vmatpush1.bf16.msra.mxu0 0
      %419 = vmatprep.subr.bf16.mxu0 0
      %420 = vmatpush1.bf16.msra.mxu0 0
      %421 = vmatprep.subr.bf16.mxu0 0
      %422 = vmatpush1.bf16.msra.mxu0 0
      %423 = vmatprep.subr.bf16.mxu0 0
      %424 = vmatpush1.bf16.msra.mxu0 0
      %425 = vmatprep.subr.bf16.mxu0 0
      %426 = vmatpush1.bf16.msra.mxu0 0
      %427 = vmatprep.subr.bf16.mxu0 0
      %428 = vmatpush1.bf16.msra.mxu0 0
      %429 = vmatprep.mubr.bf16.mxu0 0
      %430 = vmatmul.mubr.bf16.gmra.mrb[0].mxu0 %v386
      %v431 = vpop.f32.mrb[0].mxu0
      %v432 = vadd.f32 %v340, %v431
      %v433 = vpop.f32.mrb[0].mxu0
      %v434 = vadd.f32 %v341, %v433
      %v435 = vpop.f32.mrb[0].mxu0
      %v436 = vadd.f32 %v343, %v435
      %v437 = vpop.f32.mrb[0].mxu0
      %v438 = vadd.f32 %v344, %v437
      %439 = vmatprep.mubr.bf16.mxu0 0
      %440 = vmatmul.mubr.bf16.gmra.mrb[0].mxu0 %v389
      %v441 = vpop.f32.mrb[0].mxu0
      %v442 = vadd.f32 %v346, %v441
      %v443 = vpop.f32.mrb[0].mxu0
      %v444 = vadd.f32 %v347, %v443
      %v445 = vpop.f32.mrb[0].mxu0
      %v446 = vadd.f32 %v349, %v445
      %v447 = vpop.f32.mrb[0].mxu0
      %v448 = vadd.f32 %v350, %v447
      %449 = vmatprep.mubr.bf16.mxu0 0
      %450 = vmatmul.mubr.bf16.gmra.mrb[0].mxu0 %v392
      %v451 = vpop.f32.mrb[0].mxu0
      %v452 = vadd.f32 %v352, %v451
      %v453 = vpop.f32.mrb[0].mxu0
      %v454 = vadd.f32 %v353, %v453
      %v455 = vpop.f32.mrb[0].mxu0
      %v456 = vadd.f32 %v355, %v455
      %v457 = vpop.f32.mrb[0].mxu0
      %v458 = vadd.f32 %v356, %v457
      %459 = vmatprep.mubr.bf16.mxu0 0
      %460 = vmatmul.mubr.bf16.gmra.mrb[0].mxu0 %v395
      %v461 = vpop.f32.mrb[0].mxu0
      %v462 = vadd.f32 %v358, %v461
      %v463 = vpop.f32.mrb[0].mxu0
      %v464 = vadd.f32 %v359, %v463
      %v465 = vpop.f32.mrb[0].mxu0
      %v466 = vadd.f32 %v361, %v465
      %v467 = vpop.f32.mrb[0].mxu0
      %v468 = vadd.f32 %v362, %v467
      %469 = vdwg.mxu0
      %470 = vmatprep.subr.bf16.mxu0 0
      %471 = vmatpush1.bf16.msra.mxu0 %v320
      %472 = vmatprep.subr.bf16.mxu0 0
      %473 = vmatpush1.bf16.msra.mxu0 %v323
      %474 = vmatprep.subr.bf16.mxu0 0
      %475 = vmatpush1.bf16.msra.mxu0 0
      %476 = vmatprep.subr.bf16.mxu0 0
      %477 = vmatpush1.bf16.msra.mxu0 0
      %478 = vmatprep.subr.bf16.mxu0 0
      %479 = vmatpush1.bf16.msra.mxu0 0
      %480 = vmatprep.subr.bf16.mxu0 0
      %481 = vmatpush1.bf16.msra.mxu0 0
      %482 = vmatprep.subr.bf16.mxu0 0
      %483 = vmatpush1.bf16.msra.mxu0 0
      %484 = vmatprep.subr.bf16.mxu0 0
      %485 = vmatpush1.bf16.msra.mxu0 0
      %486 = vmatprep.subr.bf16.mxu0 0
      %487 = vmatpush1.bf16.msra.mxu0 0
      %488 = vmatprep.subr.bf16.mxu0 0
      %489 = vmatpush1.bf16.msra.mxu0 0
      %490 = vmatprep.subr.bf16.mxu0 0
      %491 = vmatpush1.bf16.msra.mxu0 0
      %492 = vmatprep.subr.bf16.mxu0 0
      %493 = vmatpush1.bf16.msra.mxu0 0
      %494 = vmatprep.subr.bf16.mxu0 0
      %495 = vmatpush1.bf16.msra.mxu0 0
      %496 = vmatprep.subr.bf16.mxu0 0
      %497 = vmatpush1.bf16.msra.mxu0 0
      %498 = vmatprep.subr.bf16.mxu0 0
      %499 = vmatpush1.bf16.msra.mxu0 0
      %500 = vmatprep.subr.bf16.mxu0 0
      %501 = vmatpush1.bf16.msra.mxu0 0
      %502 = vmatprep.mubr.bf16.mxu0 0
      %503 = vmatmul.mubr.bf16.gmra.mrb[0].mxu0 %v386
      %v504 = vpop.f32.mrb[0].mxu0
      %v505 = vadd.f32 %v342, %v504
      %v506 = vpop.f32.mrb[0].mxu0
      %v507 = vpop.f32.mrb[0].mxu0
      %v508 = vadd.f32 %v345, %v507
      %v509 = vpop.f32.mrb[0].mxu0
      %510 = vmatprep.mubr.bf16.mxu0 0
      %511 = vmatmul.mubr.bf16.gmra.mrb[0].mxu0 %v389
      %v512 = vpop.f32.mrb[0].mxu0
      %v513 = vadd.f32 %v348, %v512
      %v514 = vpop.f32.mrb[0].mxu0
      %v515 = vpop.f32.mrb[0].mxu0
      %v516 = vadd.f32 %v351, %v515
      %v517 = vpop.f32.mrb[0].mxu0
      %518 = vmatprep.mubr.bf16.mxu0 0
      %519 = vmatmul.mubr.bf16.gmra.mrb[0].mxu0 %v392
      %v520 = vpop.f32.mrb[0].mxu0
      %v521 = vadd.f32 %v354, %v520
      %v522 = vpop.f32.mrb[0].mxu0
      %v523 = vpop.f32.mrb[0].mxu0
      %v524 = vadd.f32 %v357, %v523
      %v525 = vpop.f32.mrb[0].mxu0
      %526 = vmatprep.mubr.bf16.mxu0 0
      %527 = vmatmul.mubr.bf16.gmra.mrb[0].mxu0 %v395
      %v528 = vpop.f32.mrb[0].mxu0
      %v529 = vadd.f32 %v360, %v528
      %v530 = vpop.f32.mrb[0].mxu0
      %v531 = vpop.f32.mrb[0].mxu0
      %v532 = vadd.f32 %v363, %v531
      %v533 = vpop.f32.mrb[0].mxu0
      %534 = vdwg.mxu0
      %v535 = vmul.f32 %v432, 0.2
      %v536 = vmul.f32 %v434, 0.2
      %v537 = vmul.f32 %v505, 0.2
      %v538 = vmul.f32 %v436, 0.2
      %v539 = vmul.f32 %v438, 0.2
      %v540 = vmul.f32 %v508, 0.2
      %v541 = vmul.f32 %v442, 0.2
      %v542 = vmul.f32 %v444, 0.2
      %v543 = vmul.f32 %v513, 0.2
      %v544 = vmul.f32 %v446, 0.2
      %v545 = vmul.f32 %v448, 0.2
      %v546 = vmul.f32 %v516, 0.2
      %v547 = vmul.f32 %v452, 0.2
      %v548 = vmul.f32 %v454, 0.2
      %v549 = vmul.f32 %v521, 0.2
      %v550 = vmul.f32 %v456, 0.2
      %v551 = vmul.f32 %v458, 0.2
      %v552 = vmul.f32 %v524, 0.2
      %v553 = vmul.f32 %v462, 0.2
      %v554 = vmul.f32 %v464, 0.2
      %v555 = vmul.f32 %v529, 0.2
      %v556 = vmul.f32 %v466, 0.2
      %v557 = vmul.f32 %v468, 0.2
      %v558 = vmul.f32 %v532, 0.2
      %v559 = vmax.f32 %v432, %v535
      %v560 = vmax.f32 %v434, %v536
      %v561 = vmax.f32 %v505, %v537
      %v562 = vmax.f32 %v436, %v538
      %v563 = vmax.f32 %v438, %v539
      %v564 = vmax.f32 %v508, %v540
      %v565 = vmax.f32 %v442, %v541
      %v566 = vmax.f32 %v444, %v542
      %v567 = vmax.f32 %v513, %v543
      %v568 = vmax.f32 %v446, %v544
      %v569 = vmax.f32 %v448, %v545
      %v570 = vmax.f32 %v516, %v546
      %v571 = vmax.f32 %v452, %v547
      %v572 = vmax.f32 %v454, %v548
      %v573 = vmax.f32 %v521, %v549
      %v574 = vmax.f32 %v456, %v550
      %v575 = vmax.f32 %v458, %v551
      %v576 = vmax.f32 %v524, %v552
      %v577 = vmax.f32 %v462, %v553
      %v578 = vmax.f32 %v464, %v554
      %v579 = vmax.f32 %v529, %v555
      %v580 = vmax.f32 %v466, %v556
      %v581 = vmax.f32 %v468, %v557
      %v582 = vmax.f32 %v532, %v558
      %v583 = vpack.c.bf16 %v562, %v559
      %v584 = vpack.c.bf16 %v563, %v560
      %v585 = vpack.c.bf16 %v564, %v561
      %v586 = vpack.c.bf16 %v568, %v565
      %v587 = vpack.c.bf16 %v569, %v566
      %v588 = vpack.c.bf16 %v570, %v567
      %v589 = vpack.c.bf16 %v574, %v571
      %v590 = vpack.c.bf16 %v575, %v572
      %v591 = vpack.c.bf16 %v576, %v573
      %v592 = vpack.c.bf16 %v580, %v577
      %v593 = vpack.c.bf16 %v581, %v578
      %v594 = vpack.c.bf16 %v582, %v579
      %v607 = vunpack.c.l.b16 %v583
      %v608 = vunpack.c.l.b16 %v584
      %v609 = vunpack.c.l.b16 %v585
      %v610 = vunpack.c.h.b16 %v583
      %v611 = vunpack.c.h.b16 %v584
      %v612 = vunpack.c.h.b16 %v585
      %v613 = vunpack.c.l.b16 %v586
      %v614 = vunpack.c.l.b16 %v587
      %v615 = vunpack.c.l.b16 %v588
      %v616 = vunpack.c.h.b16 %v586
      %v617 = vunpack.c.h.b16 %v587
      %v618 = vunpack.c.h.b16 %v588
      %v619 = vunpack.c.l.b16 %v589
      %v620 = vunpack.c.l.b16 %v590
      %v621 = vunpack.c.l.b16 %v591
      %v622 = vunpack.c.h.b16 %v589
      %v623 = vunpack.c.h.b16 %v590
      %v624 = vunpack.c.h.b16 %v591
      %v625 = vunpack.c.l.b16 %v592
      %v626 = vunpack.c.l.b16 %v593
      %v627 = vunpack.c.l.b16 %v594
      %v628 = vunpack.c.h.b16 %v592
      %v629 = vunpack.c.h.b16 %v593
      %v630 = vunpack.c.h.b16 %v594
      %v631 = vpack.c.b16 %v608, %v607
      %v632 = vpack.c.b16 %v609, %v609
      %v633 = vpack.c.b16 %v611, %v610
      %v634 = vpack.c.b16 %v612, %v612
      %v635 = vpack.c.b16 %v614, %v613
      %v636 = vpack.c.b16 %v615, %v615
      %v637 = vpack.c.b16 %v617, %v616
      %v638 = vpack.c.b16 %v618, %v618
      %v639 = vpack.c.b16 %v620, %v619
      %v640 = vpack.c.b16 %v621, %v621
      %v641 = vpack.c.b16 %v623, %v622
      %v642 = vpack.c.b16 %v624, %v624
      %v643 = vpack.c.b16 %v626, %v625
      %v644 = vpack.c.b16 %v627, %v627
      %v645 = vpack.c.b16 %v629, %v628
      %v646 = vpack.c.b16 %v630, %v630
      %663 = vst [vmem:[%s214] sm:$0xff] %v631
      %664 = vst.msk [vmem:[%s214 + $0x8] sm:$0xf] %vm232, %v632
      %665 = vst [vmem:[%s214 + $0xc] sm:$0xff] %v633
      %666 = vst.msk [vmem:[%s214 + $0x14] sm:$0xf] %vm232, %v634
      %667 = vst [vmem:[%s214 + $0x18] sm:$0xff] %v635
      %668 = vst.msk [vmem:[%s214 + $0x20] sm:$0xf] %vm232, %v636
      %669 = vst [vmem:[%s214 + $0x24] sm:$0xff] %v637
      %670 = vst.msk [vmem:[%s214 + $0x2c] sm:$0xf] %vm232, %v638
      %671 = vst [vmem:[%s214 + $0x30] sm:$0xff] %v639
      %672 = vst.msk [vmem:[%s214 + $0x38] sm:$0xf] %vm232, %v640
      %673 = vst [vmem:[%s214 + $0x3c] sm:$0xff] %v641
      %674 = vst.msk [vmem:[%s214 + $0x44] sm:$0xf] %vm232, %v642
      %675 = vst [vmem:[%s214 + $0x48] sm:$0xff] %v643
      %676 = vst.msk [vmem:[%s214 + $0x50] sm:$0xf] %vm232, %v644
      %677 = vst [vmem:[%s214 + $0x54] sm:$0xff] %v645
      %678 = vst.msk [vmem:[%s214 + $0x5c] sm:$0xf] %vm232, %v646
      %s679 = smul.u32 3, %s18
      %p680 = scmp.lt.s32.totalorder %s19, 1
      %s681 = scalar_select %p680, %s19, 1
      %p682 = scmp.lt.s32.totalorder %s679, 2
      %s683 = scalar_select %p682, %s679, 2
      %s684 = smul.addr %s681, 24
      %s685 = sadd.s32 %s683, %s684
      %s686 = smul.addr %s685, 4
      %s687 = scalar_lea.vmem %s3, %s686
      // Predicated region
      $region33: #{conv_upsample.2} parent=31 // pred_check
        %p688 = pneg %p119
      $region34: #{conv_upsample.2} parent=31 // pred_check_branch
        %690 = sbr.rel (%p688) target = $region36
      $region35: #{conv_upsample.2} parent=31 // pred_region
        %s691 = smul.u32 3, %s18
      $region36: #{conv_upsample.2} parent=31 // pred_fallthru
        _
    $region32: #{conv_upsample.2} parent=5 // pred_fallthru
      _
    %p692 = scmp.le.s32.totalorder 2, %s9
    // Predicated region
    $region37: #{conv_upsample.2} parent=5 // pred_check
      %p693 = pneg %p692
    $region38: #{conv_upsample.2} parent=5 // pred_check_branch
      %695 = sbr.rel (%p693) target = $region40
    $region39: #{conv_upsample.2} parent=5 // pred_region
      %s696 = ssub.s32 %s9, 2
      // Predicated region
      $region41: #{conv_upsample.2} parent=39 // pred_check
        %p697 = pneg %p125
      $region42: #{conv_upsample.2} parent=39 // pred_check_branch
        %699 = sbr.rel (%p697) target = $region44
      $region43: #{conv_upsample.2} parent=39 // pred_region
        %s700 = smul.u32 3, %s20
        %p701 = scmp.lt.s32.totalorder %s21, 1
        %s702 = scalar_select %p701, %s21, 1
        %p703 = scmp.lt.s32.totalorder %s700, 2
        %s704 = scalar_select %p703, %s700, 2
        %s705 = smul.addr %s702, 24
        %s706 = sadd.s32 %s704, %s705
        %s707 = smul.addr %s706, 4
        %s708 = scalar_lea.vmem %s3, %s707
      $region44: #{conv_upsample.2} parent=39 // pred_fallthru
        _
    $region40: #{conv_upsample.2} parent=5 // pred_fallthru
      _
  $region6: #{conv_upsample.2} parent=0 // loop_footer
    %s13 = sadd.s32 1, %s9
  $region7: #{conv_upsample.2} parent=0 // loop_footer_branch
    %8 = sbr.rel target = $region3
  $region8: #{conv_upsample.2} parent=0 // loop_exit
    _

// kernel: conv_upsample.3
$region0: #{conv_upsample.3}
  #allocation0 [shape = 'u32[]', space=smem, size = 0x4, offset = 0x4, fixed_abs, tag = 'smem constant byte address 0x4 - core index']
  #allocation1 [shape = 'u32[144,128]{1,0:T(1,128)}', space=vmem, size = 0x12000, scoped, tag = 'internal scratch']
  #allocation2 [shape = 'bf16[64,1122]{1,0:T(16,128)(2,1)}', space=vmem, size = 0x24000, scoped, tag = 'scratch operand']
  %s0 = inlined_call_operand.vmem [shape: bf16[2,16,1158], index: 0, kind: input, shape index: {}]
  %s1 = inlined_call_operand.vmem [shape: bf16[32,64], index: 1, kind: input, shape index: {}]
  %s2 = inlined_call_operand.vmem [shape: bf16[32,1122], index: 2, kind: input, shape index: {}]
  %s3 = inlined_call_operand.vmem [shape: f32[2,32,1122], index: 3, kind: output, shape index: {}]
  %s4 = sld [smem:[#allocation0]]
  $region45: #{conv_upsample.3} parent=0
    _
  %s6 = ssub.s32 1, %s4
  %s7 = scalar_select 0, %s6, %s4
  loop: start=0, step=1, limit=4
  $region2: #{conv_upsample.3} parent=0 // loop_pre_header
    _
  $region3: #{conv_upsample.3} parent=0 // loop_header
    %s9 = sphi 0, %s13
    %p10 = scmp.ge.s32.totalorder %s9, 4
    %s16 = sphi 0, %s28
    %s17 = sphi 0, %s24
    %s18 = sphi 0, %s16
    %s19 = sphi 0, %s17
    %s20 = sphi 0, %s18
    %s21 = sphi 0, %s19
    %s31 = sphi 0, %s33
    %s34 = sphi 0, %s31
    %s35 = sphi 0, %s34
    %s51 = sphi 0, %s35
    %s55 = sphi 0, %s55
    %s57 = sphi 0, %s55
    %s58 = sphi 0, %s57
    %s72 = sphi 0, %s58
    %s78 = sphi 0, %s80
    %s81 = sphi 0, %s78
    %s82 = sphi 0, %s81
    %s98 = sphi 0, %s82
    %s106 = sphi 0, %s108
    %s109 = sphi 0, %s106
    %s110 = sphi 0, %s109
    %s126 = sphi 0, %s110
  $region4: #{conv_upsample.3} parent=0 // loop_header_branch
    %12 = sbr.rel (%p10) target = $region8
  $region5: #{conv_upsample.3} parent=0 // loop_body
    %s14 = ssub.s32 %s9, 1
    %s15 = ssub.s32 %s9, 2
    %s22 = sadd.s32 1, %s17
    %p23 = scmp.ge.s32.totalorder %s22, 2
    %s24 = scalar_select %p23, 0, %s22
    %s25 = sadd.s32 1, %s16
    %s26 = scalar_select %p23, %s25, %s16
    %p27 = scmp.ge.s32.totalorder %s26, 1
    %s28 = scalar_select %p27, 0, %s26
    %s29 = ssub.s32 %s17, %s24
    %p30 = scmp.eq.s32.totalorder %s29, 0
    %s32 = sadd.s32 %s31, 1
    %s33 = scalar_select %p30, %s31, %s32
    %p36 = pneg %p30
    %p37 = scmp.eq.s32.totalorder %s9, 1
    %p38 = por %p36, %p37
    %p39 = scmp.ne.s32.totalorder %s31, %s34
    %p40 = scmp.eq.s32.totalorder %s9, 0
    %p41 = por %p39, %p40
    %p42 = scmp.ne.s32.totalorder %s31, %s34
    %p43 = scmp.eq.s32.totalorder %s14, 1
    %p44 = por %p42, %p43
    %p45 = scmp.ne.s32.totalorder %s34, %s35
    %p46 = scmp.eq.s32.totalorder %s14, 0
    %p47 = por %p45, %p46
    %p48 = scmp.ne.s32.totalorder %s34, %s35
    %p49 = scmp.eq.s32.totalorder %s15, 1
    %p50 = por %p48, %p49
    %p52 = scmp.ne.s32.totalorder %s35, %s51
    %p53 = scmp.eq.s32.totalorder %s15, 0
    %p54 = por %p52, %p53
    %s56 = sadd.s32 %s55, 1
    %p59 = scmp.eq.s32.totalorder %s9, 1
    %p60 = scmp.ne.s32.totalorder %s55, %s57
    %p61 = scmp.eq.s32.totalorder %s9, 0
    %p62 = por %p60, %p61
    %p63 = scmp.ne.s32.totalorder %s55, %s57
    %p64 = scmp.eq.s32.totalorder %s14, 1
    %p65 = por %p63, %p64
    %p66 = scmp.ne.s32.totalorder %s57, %s58
    %p67 = scmp.eq.s32.totalorder %s14, 0
    %p68 = por %p66, %p67
    %p69 = scmp.ne.s32.totalorder %s57, %s58
    %p70 = scmp.eq.s32.totalorder %s15, 1
    %p71 = por %p69, %p70
    %p73 = scmp.ne.s32.totalorder %s58, %s72
    %p74 = scmp.eq.s32.totalorder %s15, 0
    %p75 = por %p73, %p74
    %s76 = ssub.s32 %s16, %s28
    %p77 = scmp.eq.s32.totalorder %s76, 0
    %s79 = sadd.s32 %s78, 1
    %s80 = scalar_select %p77, %s78, %s79
    %p83 = pneg %p77
    %p84 = scmp.eq.s32.totalorder %s9, 1
    %p85 = por %p83, %p84
    %p86 = scmp.ne.s32.totalorder %s78, %s81
    %p87 = scmp.eq.s32.totalorder %s9, 0
    %p88 = por %p86, %p87
    %p89 = scmp.ne.s32.totalorder %s78, %s81
    %p90 = scmp.eq.s32.totalorder %s14, 1
    %p91 = por %p89, %p90
    %p92 = scmp.ne.s32.totalorder %s81, %s82
    %p93 = scmp.eq.s32.totalorder %s14, 0
    %p94 = por %p92, %p93
    %p95 = scmp.ne.s32.totalorder %s81, %s82
    %p96 = scmp.eq.s32.totalorder %s15, 1
    %p97 = por %p95, %p96
    %p99 = scmp.ne.s32.totalorder %s82, %s98
    %p100 = scmp.eq.s32.totalorder %s15, 0
    %p101 = por %p99, %p100
    %s102 = ssub.s32 %s17, %s24
    %s103 = ssub.s32 %s16, %s28
    %s104 = sor.u32 %s102, %s103
    %p105 = scmp.eq.s32.totalorder %s104, 0
    %s107 = sadd.s32 %s106, 1
    %s108 = scalar_select %p105, %s106, %s107
    %p111 = pneg %p105
    %p112 = scmp.eq.s32.totalorder %s9, 1
    %p113 = por %p111, %p112
    %p114 = scmp.ne.s32.totalorder %s106, %s109
    %p115 = scmp.eq.s32.totalorder %s9, 0
    %p116 = por %p114, %p115
    %p117 = scmp.ne.s32.totalorder %s106, %s109
    %p118 = scmp.eq.s32.totalorder %s14, 1
    %p119 = por %p117, %p118
    %p120 = scmp.ne.s32.totalorder %s109, %s110
    %p121 = scmp.eq.s32.totalorder %s14, 0
    %p122 = por %p120, %p121
    %p123 = scmp.ne.s32.totalorder %s109, %s110
    %p124 = scmp.eq.s32.totalorder %s15, 1
    %p125 = por %p123, %p124
    %p127 = scmp.ne.s32.totalorder %s110, %s126
    %p128 = scmp.eq.s32.totalorder %s15, 0
    %p129 = por %p127, %p128
    %p130 = scmp.le.s32.totalorder 1, %s9
    %p131 = scmp.lt.s32.totalorder %s9, 3
    %p132 = pnand %p130, %p131
    %p133 = pneg %p132
    // Predicated region
    $region9: #{conv_upsample.3} parent=5 // pred_check
      _
    $region10: #{conv_upsample.3} parent=5 // pred_check_branch
      %135 = sbr.rel (%p132) target = $region12
    $region11: #{conv_upsample.3} parent=5 // pred_region
      %s136 = ssub.s32 %s9, 1
      // Predicated region
      $region13: #{conv_upsample.3} parent=11 // pred_check
        %p137 = pneg %p68
      $region14: #{conv_upsample.3} parent=11 // pred_check_branch
        %139 = sbr.rel (%p137) target = $region16
      $region15: #{conv_upsample.3} parent=11 // pred_region
        _
      $region16: #{conv_upsample.3} parent=11 // pred_fallthru
        _
      // Predicated region
      $region17: #{conv_upsample.3} parent=11 // pred_check
        %p140 = pneg %p94
      $region18: #{conv_upsample.3} parent=11 // pred_check_branch
        %142 = sbr.rel (%p140) target = $region20
      $region19: #{conv_upsample.3} parent=11 // pred_region
        %s143 = smul.u32 9, %s18
        %p144 = scmp.lt.s32.totalorder %s143, 8
        %s145 = scalar_select %p144, %s143, 8
        %s146 = smul.addr %s145, 4
        %s147 = scalar_lea.vmem %s2, %s146
        %s148 = smul.u32 9, %s18
      $region20: #{conv_upsample.3} parent=11 // pred_fallthru
        _
    $region12: #{conv_upsample.3} parent=5 // pred_fallthru
      _
    %p149 = scmp.lt.s32.totalorder %s9, 2
    // Predicated region
    $region21: #{conv_upsample.3} parent=5 // pred_check
      %p150 = pneg %p149
    $region22: #{conv_upsample.3} parent=5 // pred_check_branch
      %152 = sbr.rel (%p150) target = $region24
    $region23: #{conv_upsample.3} parent=5 // pred_region
      // Predicated region
      $region25: #{conv_upsample.3} parent=23 // pred_check
        %p153 = pneg %p41
      $region26: #{conv_upsample.3} parent=23 // pred_check_branch
        %155 = sbr.rel (%p153) target = $region28
      $region27: #{conv_upsample.3} parent=23 // pred_region
        %p156 = scmp.lt.s32.totalorder %s17, 1
        %s157 = scalar_select %p156, %s17, 1
        %s158 = smul.addr %s157, 20
        %s159 = smul.addr %s158, 4
        %s160 = scalar_lea.vmem %s0, %s159
      $region28: #{conv_upsample.3} parent=23 // pred_fallthru
        _
    $region24: #{conv_upsample.3} parent=5 // pred_fallthru
      _
    %p161 = scmp.le.s32.totalorder 1, %s9
    %p162 = scmp.lt.s32.totalorder %s9, 3
    %p163 = pnand %p161, %p162
    %p164 = pneg %p163
    // Predicated region
    $region29: #{conv_upsample.3} parent=5 // pred_check
      _
    $region30: #{conv_upsample.3} parent=5 // pred_check_branch
      %166 = sbr.rel (%p163) target = $region32
    $region31: #{conv_upsample.3} parent=5 // pred_region
      %s167 = ssub.s32 %s9, 1
      %p168 = scmp.lt.s32.totalorder %s19, 1
      %s169 = scalar_select %p168, %s19, 1
      %s170 = smul.addr %s169, 20
      %s171 = smul.addr %s170, 4
      %s172 = scalar_lea.vmem %s0, %s171
      %p173 = pneg %p47
      %p174 = pneg %p44
      %p175 = pneg %p68
      %p176 = pneg %p65
      %s177 = smul.u32 9, %s18
      %p178 = scmp.lt.s32.totalorder %s177, 8
      %s179 = scalar_select %p178, %s177, 8
      %s180 = smul.addr %s179, 4
      %s181 = scalar_lea.vmem %s2, %s180
      %p182 = pneg %p94
      %p183 = pneg %p91
      %p184 = pneg %p122
      %p185 = pneg %p119
      %s186 = smul.u32 9, %s18
      %p187 = scmp.lt.s32.totalorder %s19, 1
      %s188 = scalar_select %p187, %s19, 1
      %p189 = scmp.lt.s32.totalorder %s186, 8
      %s190 = scalar_select %p189, %s186, 8
      %s191 = smul.addr %s188, 36
      %s192 = sadd.s32 %s190, %s191
      %s193 = smul.addr %s192, 8
      %s194 = scalar_lea.vmem %s3, %s193
      %p195 = scmp.lt.s32.totalorder %s19, 1
      %s196 = scalar_select %p195, %s19, 1
      %s197 = smul.addr %s196, 20
      %s198 = smul.addr %s197, 4
      %s199 = scalar_lea.vmem %s0, %s198
      %s200 = smul.u32 9, %s18
      %p201 = scmp.lt.s32.totalorder %s200, 8
      %s202 = scalar_select %p201, %s200, 8
      %s203 = smul.addr %s202, 4
      %s204 = scalar_lea.vmem %s2, %s203
      %s205 = smul.u32 9, %s18
      %s206 = smul.u32 9, %s18
      %p207 = scmp.lt.s32.totalorder %s19, 1
      %s208 = scalar_select %p207, %s19, 1
      %p209 = scmp.lt.s32.totalorder %s206, 8
      %s210 = scalar_select %p209, %s206, 8
      %s211 = smul.addr %s208, 36
      %s212 = sadd.s32 %s210, %s211
      %s213 = smul.addr %s212, 8
      %s214 = scalar_lea.vmem %s3, %s213
      %s215 = smul.u32 9, %s18
      %v217 = vld [vmem:[%s199] sm:$0xff]
      %v218 = vld [vmem:[%s199 + $0x8] sm:$0xff]
      %v219 = vld [vmem:[%s199 + $0x10] sm:$0xff]
      %v220 = vld [vmem:[%s199 + $0x18] sm:$0xff]
      %v221 = vld [vmem:[%s199 + $0x20] sm:$0xf]
      %v222 = vld [vmem:[%s199 + $0x28] sm:$0xff]
      %v223 = vld [vmem:[%s199 + $0x30] sm:$0xff]
      %v224 = vld [vmem:[%s199 + $0x38] sm:$0xff]
      %v225 = vld [vmem:[%s199 + $0x40] sm:$0xff]
      %v226 = vld [vmem:[%s199 + $0x48] sm:$0xf]
      %v237 = vunpack.c.l.b16 %v217
      %v238 = vunpack.c.h.b16 %v217
      %v239 = vunpack.c.l.b16 %v218
      %v240 = vunpack.c.h.b16 %v218
      %v241 = vunpack.c.l.b16 %v219
      %v242 = vunpack.c.h.b16 %v219
      %v243 = vunpack.c.l.b16 %v220
      %v244 = vunpack.c.h.b16 %v220
      %v245 = vunpack.c.l.b16 %v221
      %v246 = vunpack.c.l.b16 %v222
      %v247 = vunpack.c.h.b16 %v222
      %v248 = vunpack.c.l.b16 %v223
      %v249 = vunpack.c.h.b16 %v223
      %v250 = vunpack.c.l.b16 %v224
      %v251 = vunpack.c.h.b16 %v224
      %v252 = vunpack.c.l.b16 %v225
      %v253 = vunpack.c.h.b16 %v225
      %v254 = vunpack.c.l.b16 %v226
      %v255 = vpack.c.b16 %v246, %v237
      %v256 = vpack.c.b16 %v247, %v238
      %v257 = vpack.c.b16 %v248, %v239
      %v258 = vpack.c.b16 %v249, %v240
      %v259 = vpack.c.b16 %v250, %v241
      %v260 = vpack.c.b16 %v251, %v242
      %v261 = vpack.c.b16 %v252, %v243
      %v262 = vpack.c.b16 %v253, %v244
      %v263 = vpack.c.b16 %v254, %v245
      %273 = vst [vmem:[#allocation2] sm:$0xff] %v255
      %274 = vst [vmem:[#allocation2 + $0x8] sm:$0xff] %v256
      %275 = vst [vmem:[#allocation2 + $0x10] sm:$0xff] %v257
      %276 = vst [vmem:[#allocation2 + $0x18] sm:$0xff] %v258
      %277 = vst [vmem:[#allocation2 + $0x20] sm:$0xff] %v259
      %278 = vst [vmem:[#allocation2 + $0x28] sm:$0xff] %v260
      %279 = vst [vmem:[#allocation2 + $0x30] sm:$0xff] %v261
      %280 = vst [vmem:[#allocation2 + $0x38] sm:$0xff] %v262
      %vm281 = vcmask 801792
      %282 = vst.msk [vmem:[#allocation2 + $0x40] sm:$0xff] %vm281, %v263
      %v283 = vld [vmem:[%s199] sm:$0xff]
      %v284 = vld [vmem:[%s199 + $0x8] sm:$0xff]
      %v285 = vld [vmem:[%s199 + $0x10] sm:$0xff]
      %v286 = vld [vmem:[%s199 + $0x18] sm:$0xff]
      %v287 = vld [vmem:[%s199 + $0x20] sm:$0xf]
      %v288 = vld [vmem:[%s199 + $0x28] sm:$0xff]
      %v289 = vld [vmem:[%s199 + $0x30] sm:$0xff]
      %v290 = vld [vmem:[%s199 + $0x38] sm:$0xff]
      %v291 = vld [vmem:[%s199 + $0x40] sm:$0xff]
      %v292 = vld [vmem:[%s199 + $0x48] sm:$0xf]
      %v303 = vunpack.c.l.b16 %v283
      %v304 = vunpack.c.h.b16 %v283
      %v305 = vunpack.c.l.b16 %v284
      %v306 = vunpack.c.h.b16 %v284
      %v307 = vunpack.c.l.b16 %v285
      %v308 = vunpack.c.h.b16 %v285
      %v309 = vunpack.c.l.b16 %v286
      %v310 = vunpack.c.h.b16 %v286
      %v311 = vunpack.c.l.b16 %v287
      %v312 = vunpack.c.l.b16 %v288
      %v313 = vunpack.c.h.b16 %v288
      %v314 = vunpack.c.l.b16 %v289
      %v315 = vunpack.c.h.b16 %v289
      %v316 = vunpack.c.l.b16 %v290
      %v317 = vunpack.c.h.b16 %v290
      %v318 = vunpack.c.l.b16 %v291
      %v319 = vunpack.c.h.b16 %v291
      %v320 = vunpack.c.l.b16 %v292
      %v321 = vpack.c.b16 %v312, %v303
      %v322 = vpack.c.b16 %v313, %v304
      %v323 = vpack.c.b16 %v314, %v305
      %v324 = vpack.c.b16 %v315, %v306
      %v325 = vpack.c.b16 %v316, %v307
      %v326 = vpack.c.b16 %v317, %v308
      %v327 = vpack.c.b16 %v318, %v309
      %v328 = vpack.c.b16 %v319, %v310
      %v329 = vpack.c.b16 %v320, %v311
      %330 = vrot.lane.b32.xlu0 %v321, 127
      %v331 = vpop.permute.xlu0 %330
      %332 = vrot.lane.b32.xlu0 %v322, 127
      %v333 = vpop.permute.xlu0 %332
      %334 = vrot.lane.b32.xlu0 %v323, 127
      %v335 = vpop.permute.xlu0 %334
      %336 = vrot.lane.b32.xlu0 %v324, 127
      %v337 = vpop.permute.xlu0 %336
      %338 = vrot.lane.b32.xlu0 %v325, 127
      %v339 = vpop.permute.xlu0 %338
      %340 = vrot.lane.b32.xlu0 %v326, 127
      %v341 = vpop.permute.xlu0 %340
      %342 = vrot.lane.b32.xlu0 %v327, 127
      %v343 = vpop.permute.xlu0 %342
      %344 = vrot.lane.b32.xlu0 %v328, 127
      %v345 = vpop.permute.xlu0 %344
      %346 = vrot.lane.b32.xlu0 %v329, 127
      %v347 = vpop.permute.xlu0 %346
      %vm348 = vcmask 1039360
      %v349 = vsel %vm348, %v331, %v333
      %v350 = vsel %vm348, %v333, %v335
      %v351 = vsel %vm348, %v335, %v337
      %v352 = vsel %vm348, %v337, %v339
      %v353 = vsel %vm348, %v339, %v341
      %v354 = vsel %vm348, %v341, %v343
      %v355 = vsel %vm348, %v343, %v345
      %v356 = vsel %vm348, %v345, %v347
      %366 = vst [vmem:[#allocation2 + $0x48] sm:$0xff] %v349
      %367 = vst [vmem:[#allocation2 + $0x50] sm:$0xff] %v350
      %368 = vst [vmem:[#allocation2 + $0x58] sm:$0xff] %v351
      %369 = vst [vmem:[#allocation2 + $0x60] sm:$0xff] %v352
      %370 = vst [vmem:[#allocation2 + $0x68] sm:$0xff] %v353
      %371 = vst [vmem:[#allocation2 + $0x70] sm:$0xff] %v354
      %372 = vst [vmem:[#allocation2 + $0x78] sm:$0xff] %v355
      %373 = vst [vmem:[#allocation2 + $0x80] sm:$0xff] %v356
      %374 = vst.msk [vmem:[#allocation2 + $0x88] sm:$0xff] %vm281, %v347
      %v375 = vld [vmem:[%s199] sm:$0xff]
      %v376 = vld [vmem:[%s199 + $0x8] sm:$0xff]
      %v377 = vld [vmem:[%s199 + $0x10] sm:$0xff]
      %v378 = vld [vmem:[%s199 + $0x18] sm:$0xff]
      %v379 = vld [vmem:[%s199 + $0x20] sm:$0xff]
      %v380 = vld [vmem:[%s199 + $0x28] sm:$0xff]
      %v381 = vld [vmem:[%s199 + $0x30] sm:$0xff]
      %v382 = vld [vmem:[%s199 + $0x38] sm:$0xff]
      %v383 = vld [vmem:[%s199 + $0x40] sm:$0xff]
      %v384 = vld [vmem:[%s199 + $0x48] sm:$0xff]
      %v395 = vunpack.c.l.b16 %v375
      %v396 = vunpack.c.h.b16 %v375
      %v397 = vunpack.c.l.b16 %v376
      %v398 = vunpack.c.h.b16 %v376
      %v399 = vunpack.c.l.b16 %v377
      %v400 = vunpack.c.h.b16 %v377
      %v401 = vunpack.c.l.b16 %v378
      %v402 = vunpack.c.h.b16 %v378
      %v403 = vunpack.c.l.b16 %v379
      %v404 = vunpack.c.h.b16 %v379
      %v405 = vunpack.c.l.b16 %v380
      %v406 = vunpack.c.h.b16 %v380
      %v407 = vunpack.c.l.b16 %v381
      %v408 = vunpack.c.h.b16 %v381
      %v409 = vunpack.c.l.b16 %v382
      %v410 = vunpack.c.h.b16 %v382
      %v411 = vunpack.c.l.b16 %v383
      %v412 = vunpack.c.h.b16 %v383
      %v413 = vunpack.c.l.b16 %v384
      %v414 = vunpack.c.h.b16 %v384
      %v415 = vpack.c.b16 %v405, %v395
      %v416 = vpack.c.b16 %v406, %v396
      %v417 = vpack.c.b16 %v407, %v397
      %v418 = vpack.c.b16 %v408, %v398
      %v419 = vpack.c.b16 %v409, %v399
      %v420 = vpack.c.b16 %v410, %v400
      %v421 = vpack.c.b16 %v411, %v401
      %v422 = vpack.c.b16 %v412, %v402
      %v423 = vpack.c.b16 %v413, %v403
      %v424 = vpack.c.b16 %v414, %v404
      %425 = vrot.lane.b32.xlu0 %v415, 94
      %v426 = vpop.permute.xlu0 %425
      %427 = vrot.lane.b32.xlu0 %v416, 94
      %v428 = vpop.permute.xlu0 %427
      %429 = vrot.lane.b32.xlu0 %v417, 94
      %v430 = vpop.permute.xlu0 %429
      %431 = vrot.lane.b32.xlu0 %v418, 94
      %v432 = vpop.permute.xlu0 %431
      %433 = vrot.lane.b32.xlu0 %v419, 94
      %v434 = vpop.permute.xlu0 %433
      %435 = vrot.lane.b32.xlu0 %v420, 94
      %v436 = vpop.permute.xlu0 %435
      %437 = vrot.lane.b32.xlu0 %v421, 94
      %v438 = vpop.permute.xlu0 %437
      %439 = vrot.lane.b32.xlu0 %v422, 94
      %v440 = vpop.permute.xlu0 %439
      %441 = vrot.lane.b32.xlu0 %v423, 94
      %v442 = vpop.permute.xlu0 %441
      %443 = vrot.lane.b32.xlu0 %v424, 94
      %v444 = vpop.permute.xlu0 %443
      %vm445 = vcmask 769024
      %v446 = vsel %vm445, %v426, %v428
      %v447 = vsel %vm445, %v428, %v430
      %v448 = vsel %vm445, %v430, %v432
      %v449 = vsel %vm445, %v432, %v434
      %v450 = vsel %vm445, %v434, %v436
      %v451 = vsel %vm445, %v436, %v438
      %v452 = vsel %vm445, %v438, %v440
      %v453 = vsel %vm445, %v440, %v442
      %v454 = vsel %vm445, %v442, %v444
      %464 = vst [vmem:[#allocation2 + $0x90] sm:$0xff] %v446
      %465 = vst [vmem:[#allocation2 + $0x98] sm:$0xff] %v447
      %466 = vst [vmem:[#allocation2 + $0xa0] sm:$0xff] %v448
      %467 = vst [vmem:[#allocation2 + $0xa8] sm:$0xff] %v449
      %468 = vst [vmem:[#allocation2 + $0xb0] sm:$0xff] %v450
      %469 = vst [vmem:[#allocation2 + $0xb8] sm:$0xff] %v451
      %470 = vst [vmem:[#allocation2 + $0xc0] sm:$0xff] %v452
      %471 = vst [vmem:[#allocation2 + $0xc8] sm:$0xff] %v453
      %472 = vst.msk [vmem:[#allocation2 + $0xd0] sm:$0xff] %vm281, %v454
      %v473 = vld [vmem:[%s199] sm:$0xff]
      %v474 = vld [vmem:[%s199 + $0x8] sm:$0xff]
      %v475 = vld [vmem:[%s199 + $0x10] sm:$0xff]
      %v476 = vld [vmem:[%s199 + $0x18] sm:$0xff]
      %v477 = vld [vmem:[%s199 + $0x20] sm:$0xff]
      %v478 = vld [vmem:[%s199 + $0x28] sm:$0xff]
      %v479 = vld [vmem:[%s199 + $0x30] sm:$0xff]
      %v480 = vld [vmem:[%s199 + $0x38] sm:$0xff]
      %v481 = vld [vmem:[%s199 + $0x40] sm:$0xff]
      %v482 = vld [vmem:[%s199 + $0x48] sm:$0xff]
      %v493 = vunpack.c.l.b16 %v473
      %v494 = vunpack.c.h.b16 %v473
      %v495 = vunpack.c.l.b16 %v474
      %v496 = vunpack.c.h.b16 %v474
      %v497 = vunpack.c.l.b16 %v475
      %v498 = vunpack.c.h.b16 %v475
      %v499 = vunpack.c.l.b16 %v476
      %v500 = vunpack.c.h.b16 %v476
      %v501 = vunpack.c.l.b16 %v477
      %v502 = vunpack.c.h.b16 %v477
      %v503 = vunpack.c.l.b16 %v478
      %v504 = vunpack.c.h.b16 %v478
      %v505 = vunpack.c.l.b16 %v479
      %v506 = vunpack.c.h.b16 %v479
      %v507 = vunpack.c.l.b16 %v480
      %v508 = vunpack.c.h.b16 %v480
      %v509 = vunpack.c.l.b16 %v481
      %v510 = vunpack.c.h.b16 %v481
      %v511 = vunpack.c.l.b16 %v482
      %v512 = vunpack.c.h.b16 %v482
      %v513 = vpack.c.b16 %v503, %v493
      %v514 = vpack.c.b16 %v504, %v494
      %v515 = vpack.c.b16 %v505, %v495
      %v516 = vpack.c.b16 %v506, %v496
      %v517 = vpack.c.b16 %v507, %v497
      %v518 = vpack.c.b16 %v508, %v498
      %v519 = vpack.c.b16 %v509, %v499
      %v520 = vpack.c.b16 %v510, %v500
      %v521 = vpack.c.b16 %v511, %v501
      %v522 = vpack.c.b16 %v512, %v502
      %523 = vrot.lane.b32.xlu0 %v513, 93
      %v524 = vpop.permute.xlu0 %523
      %525 = vrot.lane.b32.xlu0 %v514, 93
      %v526 = vpop.permute.xlu0 %525
      %527 = vrot.lane.b32.xlu0 %v515, 93
      %v528 = vpop.permute.xlu0 %527
      %529 = vrot.lane.b32.xlu0 %v516, 93
      %v530 = vpop.permute.xlu0 %529
      %531 = vrot.lane.b32.xlu0 %v517, 93
      %v532 = vpop.permute.xlu0 %531
      %533 = vrot.lane.b32.xlu0 %v518, 93
      %v534 = vpop.permute.xlu0 %533
      %535 = vrot.lane.b32.xlu0 %v519, 93
      %v536 = vpop.permute.xlu0 %535
      %537 = vrot.lane.b32.xlu0 %v520, 93
      %v538 = vpop.permute.xlu0 %537
      %539 = vrot.lane.b32.xlu0 %v521, 93
      %v540 = vpop.permute.xlu0 %539
      %541 = vrot.lane.b32.xlu0 %v522, 93
      %v542 = vpop.permute.xlu0 %541
      %vm543 = vcmask 760832
      %v544 = vsel %vm543, %v524, %v526
      %v545 = vsel %vm543, %v526, %v528
      %v546 = vsel %vm543, %v528, %v530
      %v547 = vsel %vm543, %v530, %v532
      %v548 = vsel %vm543, %v532, %v534
      %v549 = vsel %vm543, %v534, %v536
      %v550 = vsel %vm543, %v536, %v538
      %v551 = vsel %vm543, %v538, %v540
      %v552 = vsel %vm543, %v540, %v542
      %562 = vst [vmem:[#allocation2 + $0xd8] sm:$0xff] %v544
      %563 = vst [vmem:[#allocation2 + $0xe0] sm:$0xff] %v545
      %564 = vst [vmem:[#allocation2 + $0xe8] sm:$0xff] %v546
      %565 = vst [vmem:[#allocation2 + $0xf0] sm:$0xff] %v547
      %566 = vst [vmem:[#allocation2 + $0xf8] sm:$0xff] %v548
      %567 = vst [vmem:[#allocation2 + $0x100] sm:$0xff] %v549
      %568 = vst [vmem:[#allocation2 + $0x108] sm:$0xff] %v550
      %569 = vst [vmem:[#allocation2 + $0x110] sm:$0xff] %v551
      %570 = vst.msk [vmem:[#allocation2 + $0x118] sm:$0xff] %vm281, %v552
      %v571 = vld [vmem:[%s1] sm:$0xf]
      %v572 = vld [vmem:[%s1 + $0x4] sm:$0xf]
      %v573 = vld [vmem:[%s1 + $0x8] sm:$0xf]
      %v574 = vld [vmem:[%s1 + $0xc] sm:$0xf]
      %v575 = vld [vmem:[#allocation2] sm:$0xff]
      %v576 = vld [vmem:[#allocation2 + $0x8] sm:$0xff]
      %v577 = vld [vmem:[#allocation2 + $0x10] sm:$0xff]
      %v578 = vld [vmem:[#allocation2 + $0x18] sm:$0xff]
      %v579 = vld [vmem:[#allocation2 + $0x20] sm:$0xff]
      %v580 = vld [vmem:[#allocation2 + $0x28] sm:$0xff]
      %v581 = vld [vmem:[#allocation2 + $0x30] sm:$0xff]
      %v582 = vld [vmem:[#allocation2 + $0x38] sm:$0xff]
      %v583 = vld [vmem:[#allocation2 + $0x40] sm:$0xff]
      %v584 = vld [vmem:[#allocation2 + $0x48] sm:$0xff]
      %v585 = vld [vmem:[#allocation2 + $0x50] sm:$0xff]
      %v586 = vld [vmem:[#allocation2 + $0x58] sm:$0xff]
      %v587 = vld [vmem:[#allocation2 + $0x60] sm:$0xff]
      %v588 = vld [vmem:[#allocation2 + $0x68] sm:$0xff]
      %v589 = vld [vmem:[#allocation2 + $0x70] sm:$0xff]
      %v590 = vld [vmem:[#allocation2 + $0x78] sm:$0xff]
      %v591 = vld [vmem:[#allocation2 + $0x80] sm:$0xff]
      %v592 = vld [vmem:[#allocation2 + $0x88] sm:$0xff]
      %v593 = vld [vmem:[#allocation2 + $0x90] sm:$0xff]
      %v594 = vld [vmem:[#allocation2 + $0x98] sm:$0xff]
      %v595 = vld [vmem:[#allocation2 + $0xa0] sm:$0xff]
      %v596 = vld [vmem:[#allocation2 + $0xa8] sm:$0xff]
      %v597 = vld [vmem:[#allocation2 + $0xb0] sm:$0xff]
      %v598 = vld [vmem:[#allocation2 + $0xb8] sm:$0xff]
      %v599 = vld [vmem:[#allocation2 + $0xc0] sm:$0xff]
      %v600 = vld [vmem:[#allocation2 + $0xc8] sm:$0xff]
      %v601 = vld [vmem:[#allocation2 + $0xd0] sm:$0xff]
      %v602 = vld [vmem:[#allocation2 + $0xd8] sm:$0xff]
      %v603 = vld [vmem:[#allocation2 + $0xe0] sm:$0xff]
      %v604 = vld [vmem:[#allocation2 + $0xe8] sm:$0xff]
      %v605 = vld [vmem:[#allocation2 + $0xf0] sm:$0xff]
      %v606 = vld [vmem:[#allocation2 + $0xf8] sm:$0xff]
      %v607 = vld [vmem:[#allocation2 + $0x100] sm:$0xff]
      %v608 = vld [vmem:[#allocation2 + $0x108] sm:$0xff]
      %v609 = vld [vmem:[#allocation2 + $0x110] sm:$0xff]
      %v610 = vld [vmem:[#allocation2 + $0x118] sm:$0xff]
      %v611 = vld [vmem:[%s204] sm:$0xff]
      %v612 = vld [vmem:[%s204 + $0x8] sm:$0xff]
      %v613 = vld [vmem:[%s204 + $0x10] sm:$0xff]
      %v614 = vld [vmem:[%s204 + $0x18] sm:$0xff]
      %v615 = vld [vmem:[%s204 + $0x20] sm:$0xf]
      %v616 = vld [vmem:[%s204 + $0x24] sm:$0xff]
      %v617 = vld [vmem:[%s204 + $0x2c] sm:$0xff]
      %v618 = vld [vmem:[%s204 + $0x34] sm:$0xff]
      %v619 = vld [vmem:[%s204 + $0x3c] sm:$0xff]
      %v620 = vld [vmem:[%s204 + $0x44] sm:$0xf]
      %v621 = vld [vmem:[%s204 + $0x48] sm:$0xff]
      %v622 = vld [vmem:[%s204 + $0x50] sm:$0xff]
      %v623 = vld [vmem:[%s204 + $0x58] sm:$0xff]
      %v624 = vld [vmem:[%s204 + $0x60] sm:$0xff]
      %v625 = vld [vmem:[%s204 + $0x68] sm:$0xf]
      %v626 = vld [vmem:[%s204 + $0x6c] sm:$0xff]
      %v627 = vld [vmem:[%s204 + $0x74] sm:$0xff]
      %v628 = vld [vmem:[%s204 + $0x7c] sm:$0xff]
      %v629 = vld [vmem:[%s204 + $0x84] sm:$0xff]
      %v630 = vld [vmem:[%s204 + $0x8c] sm:$0xf]
      %v631 = vunpack.c.l.bf16 %v611
      %v632 = vunpack.c.h.bf16 %v611
      %v633 = vunpack.c.l.bf16 %v612
      %v634 = vunpack.c.h.bf16 %v612
      %v635 = vunpack.c.l.bf16 %v613
      %v636 = vunpack.c.h.bf16 %v613
      %v637 = vunpack.c.l.bf16 %v614
      %v638 = vunpack.c.h.bf16 %v614
      %v639 = vunpack.c.l.bf16 %v615
      %v640 = vunpack.c.l.bf16 %v616
      %v641 = vunpack.c.h.bf16 %v616
      %v642 = vunpack.c.l.bf16 %v617
      %v643 = vunpack.c.h.bf16 %v617
      %v644 = vunpack.c.l.bf16 %v618
      %v645 = vunpack.c.h.bf16 %v618
      %v646 = vunpack.c.l.bf16 %v619
      %v647 = vunpack.c.h.bf16 %v619
      %v648 = vunpack.c.l.bf16 %v620
      %v649 = vunpack.c.l.bf16 %v621
      %v650 = vunpack.c.h.bf16 %v621
      %v651 = vunpack.c.l.bf16 %v622
      %v652 = vunpack.c.h.bf16 %v622
      %v653 = vunpack.c.l.bf16 %v623
      %v654 = vunpack.c.h.bf16 %v623
      %v655 = vunpack.c.l.bf16 %v624
      %v656 = vunpack.c.h.bf16 %v624
      %v657 = vunpack.c.l.bf16 %v625
      %v658 = vunpack.c.l.bf16 %v626
      %v659 = vunpack.c.h.bf16 %v626
      %v660 = vunpack.c.l.bf16 %v627
      %v661 = vunpack.c.h.bf16 %v627
      %v662 = vunpack.c.l.bf16 %v628
      %v663 = vunpack.c.h.bf16 %v628
      %v664 = vunpack.c.l.bf16 %v629
      %v665 = vunpack.c.h.bf16 %v629
      %v666 = vunpack.c.l.bf16 %v630
      %v671 = vunpack.c.l.b16 %v571
      %v672 = vunpack.c.l.b16 %v572
      %v673 = vunpack.c.l.b16 %v573
      %v674 = vunpack.c.l.b16 %v574
      %v675 = vpack.c.b16 %v672, %v671
      %v676 = vpack.c.b16 %v674, %v673
      %vm677 = vcmask 523264
      %v679 = vsel %vm677, %v675, 0
      %v682 = vsel %vm677, %v676, 0
      %684 = vmatprep.subr.bf16.mxu0 %v576
      %685 = vmatpush1.bf16.msra.mxu0 %v575
      %686 = vmatprep.subr.bf16.mxu0 %v585
      %687 = vmatpush1.bf16.msra.mxu0 %v584
      %688 = vmatprep.subr.bf16.mxu0 %v594
      %689 = vmatpush1.bf16.msra.mxu0 %v593
      %690 = vmatprep.subr.bf16.mxu0 %v603
      %691 = vmatpush1.bf16.msra.mxu0 %v602
      %692 = vmatprep.subr.bf16.mxu0 0
      %693 = vmatpush1.bf16.msra.mxu0 0
      %694 = vmatprep.subr.bf16.mxu0 0
      %695 = vmatpush1.bf16.msra.mxu0 0
      %696 = vmatprep.subr.bf16.mxu0 0
      %697 = vmatpush1.bf16.msra.mxu0 0
      %698 = vmatprep.subr.bf16.mxu0 0
      %699 = vmatpush1.bf16.msra.mxu0 0
      %700 = vmatprep.subr.bf16.mxu0 0
      %701 = vmatpush1.bf16.msra.mxu0 0
      %702 = vmatprep.subr.bf16.mxu0 0
      %703 = vmatpush1.bf16.msra.mxu0 0
      %704 = vmatprep.subr.bf16.mxu0 0
      %705 = vmatpush1.bf16.msra.mxu0 0
      %706 = vmatprep.subr.bf16.mxu0 0
      %707 = vmatpush1.bf16.msra.mxu0 0
      %708 = vmatprep.subr.bf16.mxu0 0
      %709 = vmatpush1.bf16.msra.mxu0 0
      %710 = vmatprep.subr.bf16.mxu0 0
      %711 = vmatpush1.bf16.msra.mxu0 0
      %712 = vmatprep.subr.bf16.mxu0 0
      %713 = vmatpush1.bf16.msra.mxu0 0
      %714 = vmatprep.subr.bf16.mxu0 0
      %715 = vmatpush1.bf16.msra.mxu0 0
      %716 = vmatprep.mubr.bf16.mxu0 0
      %717 = vmatmul.mubr.bf16.gmra.mrb[0].mxu0 %v679
      %v718 = vpop.f32.mrb[0].mxu0
      %v719 = vadd.f32 %v631, %v718
      %v720 = vpop.f32.mrb[0].mxu0
      %v721 = vadd.f32 %v632, %v720
      %v722 = vpop.f32.mrb[0].mxu0
      %v723 = vadd.f32 %v640, %v722
      %v724 = vpop.f32.mrb[0].mxu0
      %v725 = vadd.f32 %v641, %v724
      %726 = vmatprep.mubr.bf16.mxu0 0
      %727 = vmatmul.mubr.bf16.gmra.mrb[0].mxu0 %v682
      %v728 = vpop.f32.mrb[0].mxu0
      %v729 = vadd.f32 %v649, %v728
      %v730 = vpop.f32.mrb[0].mxu0
      %v731 = vadd.f32 %v650, %v730
      %v732 = vpop.f32.mrb[0].mxu0
      %v733 = vadd.f32 %v658, %v732
      %v734 = vpop.f32.mrb[0].mxu0
      %v735 = vadd.f32 %v659, %v734
      %736 = vdwg.mxu0
      %737 = vmatprep.subr.bf16.mxu0 %v578
      %738 = vmatpush1.bf16.msra.mxu0 %v577
      %739 = vmatprep.subr.bf16.mxu0 %v587
      %740 = vmatpush1.bf16.msra.mxu0 %v586
      %741 = vmatprep.subr.bf16.mxu0 %v596
      %742 = vmatpush1.bf16.msra.mxu0 %v595
      %743 = vmatprep.subr.bf16.mxu0 %v605
      %744 = vmatpush1.bf16.msra.mxu0 %v604
      %745 = vmatprep.subr.bf16.mxu0 0
      %746 = vmatpush1.bf16.msra.mxu0 0
      %747 = vmatprep.subr.bf16.mxu0 0
      %748 = vmatpush1.bf16.msra.mxu0 0
      %749 = vmatprep.subr.bf16.mxu0 0
      %750 = vmatpush1.bf16.msra.mxu0 0
      %751 = vmatprep.subr.bf16.mxu0 0
      %752 = vmatpush1.bf16.msra.mxu0 0
      %753 = vmatprep.subr.bf16.mxu0 0
      %754 = vmatpush1.bf16.msra.mxu0 0
      %755 = vmatprep.subr.bf16.mxu0 0
      %756 = vmatpush1.bf16.msra.mxu0 0
      %757 = vmatprep.subr.bf16.mxu0 0
      %758 = vmatpush1.bf16.msra.mxu0 0
      %759 = vmatprep.subr.bf16.mxu0 0
      %760 = vmatpush1.bf16.msra.mxu0 0
      %761 = vmatprep.subr.bf16.mxu0 0
      %762 = vmatpush1.bf16.msra.mxu0 0
      %763 = vmatprep.subr.bf16.mxu0 0
      %764 = vmatpush1.bf16.msra.mxu0 0
      %765 = vmatprep.subr.bf16.mxu0 0
      %766 = vmatpush1.bf16.msra.mxu0 0
      %767 = vmatprep.subr.bf16.mxu0 0
      %768 = vmatpush1.bf16.msra.mxu0 0
      %769 = vmatprep.mubr.bf16.mxu0 0
      %770 = vmatmul.mubr.bf16.gmra.mrb[0].mxu0 %v679
      %v771 = vpop.f32.mrb[0].mxu0
      %v772 = vadd.f32 %v633, %v771
      %v773 = vpop.f32.mrb[0].mxu0
      %v774 = vadd.f32 %v634, %v773
      %v775 = vpop.f32.mrb[0].mxu0
      %v776 = vadd.f32 %v642, %v775
      %v777 = vpop.f32.mrb[0].mxu0
      %v778 = vadd.f32 %v643, %v777
      %779 = vmatprep.mubr.bf16.mxu0 0
      %780 = vmatmul.mubr.bf16.gmra.mrb[0].mxu0 %v682
      %v781 = vpop.f32.mrb[0].mxu0
      %v782 = vadd.f32 %v651, %v781
      %v783 = vpop.f32.mrb[0].mxu0
      %v784 = vadd.f32 %v652, %v783
      %v785 = vpop.f32.mrb[0].mxu0
      %v786 = vadd.f32 %v660, %v785
      %v787 = vpop.f32.mrb[0].mxu0
      %v788 = vadd.f32 %v661, %v787
      %789 = vdwg.mxu0
      %790 = vmatprep.subr.bf16.mxu0 %v580
      %791 = vmatpush1.bf16.msra.mxu0 %v579
      %792 = vmatprep.subr.bf16.mxu0 %v589
      %793 = vmatpush1.bf16.msra.mxu0 %v588
      %794 = vmatprep.subr.bf16.mxu0 %v598
      %795 = vmatpush1.bf16.msra.mxu0 %v597
      %796 = vmatprep.subr.bf16.mxu0 %v607
      %797 = vmatpush1.bf16.msra.mxu0 %v606
      %798 = vmatprep.subr.bf16.mxu0 0
      %799 = vmatpush1.bf16.msra.mxu0 0
      %800 = vmatprep.subr.bf16.mxu0 0
      %801 = vmatpush1.bf16.msra.mxu0 0
      %802 = vmatprep.subr.bf16.mxu0 0
      %803 = vmatpush1.bf16.msra.mxu0 0
      %804 = vmatprep.subr.bf16.mxu0 0
      %805 = vmatpush1.bf16.msra.mxu0 0
      %806 = vmatprep.subr.bf16.mxu0 0
      %807 = vmatpush1.bf16.msra.mxu0 0
      %808 = vmatprep.subr.bf16.mxu0 0
      %809 = vmatpush1.bf16.msra.mxu0 0
      %810 = vmatprep.subr.bf16.mxu0 0
      %811 = vmatpush1.bf16.msra.mxu0 0
      %812 = vmatprep.subr.bf16.mxu0 0
      %813 = vmatpush1.bf16.msra.mxu0 0
      %814 = vmatprep.subr.bf16.mxu0 0
      %815 = vmatpush1.bf16.msra.mxu0 0
      %816 = vmatprep.subr.bf16.mxu0 0
      %817 = vmatpush1.bf16.msra.mxu0 0
      %818 = vmatprep.subr.bf16.mxu0 0
      %819 = vmatpush1.bf16.msra.mxu0 0
      %820 = vmatprep.subr.bf16.mxu0 0
      %821 = vmatpush1.bf16.msra.mxu0 0
      %822 = vmatprep.mubr.bf16.mxu0 0
      %823 = vmatmul.mubr.bf16.gmra.mrb[0].mxu0 %v679
      %v824 = vpop.f32.mrb[0].mxu0
      %v825 = vadd.f32 %v635, %v824
      %v826 = vpop.f32.mrb[0].mxu0
      %v827 = vadd.f32 %v636, %v826
      %v828 = vpop.f32.mrb[0].mxu0
      %v829 = vadd.f32 %v644, %v828
      %v830 = vpop.f32.mrb[0].mxu0
      %v831 = vadd.f32 %v645, %v830
      %832 = vmatprep.mubr.bf16.mxu0 0
      %833 = vmatmul.mubr.bf16.gmra.mrb[0].mxu0 %v682
      %v834 = vpop.f32.mrb[0].mxu0
      %v835 = vadd.f32 %v653, %v834
      %v836 = vpop.f32.mrb[0].mxu0
      %v837 = vadd.f32 %v654, %v836
      %v838 = vpop.f32.mrb[0].mxu0
      %v839 = vadd.f32 %v662, %v838
      %v840 = vpop.f32.mrb[0].mxu0
      %v841 = vadd.f32 %v663, %v840
      %842 = vdwg.mxu0
      %843 = vmatprep.subr.bf16.mxu0 %v582
      %844 = vmatpush1.bf16.msra.mxu0 %v581
      %845 = vmatprep.subr.bf16.mxu0 %v591
      %846 = vmatpush1.bf16.msra.mxu0 %v590
      %847 = vmatprep.subr.bf16.mxu0 %v600
      %848 = vmatpush1.bf16.msra.mxu0 %v599
      %849 = vmatprep.subr.bf16.mxu0 %v609
      %850 = vmatpush1.bf16.msra.mxu0 %v608
      %851 = vmatprep.subr.bf16.mxu0 0
      %852 = vmatpush1.bf16.msra.mxu0 0
      %853 = vmatprep.subr.bf16.mxu0 0
      %854 = vmatpush1.bf16.msra.mxu0 0
      %855 = vmatprep.subr.bf16.mxu0 0
      %856 = vmatpush1.bf16.msra.mxu0 0
      %857 = vmatprep.subr.bf16.mxu0 0
      %858 = vmatpush1.bf16.msra.mxu0 0
      %859 = vmatprep.subr.bf16.mxu0 0
      %860 = vmatpush1.bf16.msra.mxu0 0
      %861 = vmatprep.subr.bf16.mxu0 0
      %862 = vmatpush1.bf16.msra.mxu0 0
      %863 = vmatprep.subr.bf16.mxu0 0
      %864 = vmatpush1.bf16.msra.mxu0 0
      %865 = vmatprep.subr.bf16.mxu0 0
      %866 = vmatpush1.bf16.msra.mxu0 0
      %867 = vmatprep.subr.bf16.mxu0 0
      %868 = vmatpush1.bf16.msra.mxu0 0
      %869 = vmatprep.subr.bf16.mxu0 0
      %870 = vmatpush1.bf16.msra.mxu0 0
      %871 = vmatprep.subr.bf16.mxu0 0
      %872 = vmatpush1.bf16.msra.mxu0 0
      %873 = vmatprep.subr.bf16.mxu0 0
      %874 = vmatpush1.bf16.msra.mxu0 0
      %875 = vmatprep.mubr.bf16.mxu0 0
      %876 = vmatmul.mubr.bf16.gmra.mrb[0].mxu0 %v679
      %v877 = vpop.f32.mrb[0].mxu0
      %v878 = vadd.f32 %v637, %v877
      %v879 = vpop.f32.mrb[0].mxu0
      %v880 = vadd.f32 %v638, %v879
      %v881 = vpop.f32.mrb[0].mxu0
      %v882 = vadd.f32 %v646, %v881
      %v883 = vpop.f32.mrb[0].mxu0
      %v884 = vadd.f32 %v647, %v883
      %885 = vmatprep.mubr.bf16.mxu0 0
      %886 = vmatmul.mubr.bf16.gmra.mrb[0].mxu0 %v682
      %v887 = vpop.f32.mrb[0].mxu0
      %v888 = vadd.f32 %v655, %v887
      %v889 = vpop.f32.mrb[0].mxu0
      %v890 = vadd.f32 %v656, %v889
      %v891 = vpop.f32.mrb[0].mxu0
      %v892 = vadd.f32 %v664, %v891
      %v893 = vpop.f32.mrb[0].mxu0
      %v894 = vadd.f32 %v665, %v893
      %895 = vdwg.mxu0
      %896 = vmatprep.subr.bf16.mxu0 0
      %897 = vmatpush1.bf16.msra.mxu0 %v583
      %898 = vmatprep.subr.bf16.mxu0 0
      %899 = vmatpush1.bf16.msra.mxu0 %v592
      %900 = vmatprep.subr.bf16.mxu0 0
      %901 = vmatpush1.bf16.msra.mxu0 %v601
      %902 = vmatprep.subr.bf16.mxu0 0
      %903 = vmatpush1.bf16.msra.mxu0 %v610
      %904 = vmatprep.subr.bf16.mxu0 0
      %905 = vmatpush1.bf16.msra.mxu0 0
      %906 = vmatprep.subr.bf16.mxu0 0
      %907 = vmatpush1.bf16.msra.mxu0 0
      %908 = vmatprep.subr.bf16.mxu0 0
      %909 = vmatpush1.bf16.msra.mxu0 0
      %910 = vmatprep.subr.bf16.mxu0 0
      %911 = vmatpush1.bf16.msra.mxu0 0
      %912 = vmatprep.subr.bf16.mxu0 0
      %913 = vmatpush1.bf16.msra.mxu0 0
      %914 = vmatprep.subr.bf16.mxu0 0
      %915 = vmatpush1.bf16.msra.mxu0 0
      %916 = vmatprep.subr.bf16.mxu0 0
      %917 = vmatpush1.bf16.msra.mxu0 0
      %918 = vmatprep.subr.bf16.mxu0 0
      %919 = vmatpush1.bf16.msra.mxu0 0
      %920 = vmatprep.subr.bf16.mxu0 0
      %921 = vmatpush1.bf16.msra.mxu0 0
      %922 = vmatprep.subr.bf16.mxu0 0
      %923 = vmatpush1.bf16.msra.mxu0 0
      %924 = vmatprep.subr.bf16.mxu0 0
      %925 = vmatpush1.bf16.msra.mxu0 0
      %926 = vmatprep.subr.bf16.mxu0 0
      %927 = vmatpush1.bf16.msra.mxu0 0
      %928 = vmatprep.mubr.bf16.mxu0 0
      %929 = vmatmul.mubr.bf16.gmra.mrb[0].mxu0 %v679
      %v930 = vpop.f32.mrb[0].mxu0
      %v931 = vadd.f32 %v639, %v930
      %v932 = vpop.f32.mrb[0].mxu0
      %v933 = vpop.f32.mrb[0].mxu0
      %v934 = vadd.f32 %v648, %v933
      %v935 = vpop.f32.mrb[0].mxu0
      %936 = vmatprep.mubr.bf16.mxu0 0
      %937 = vmatmul.mubr.bf16.gmra.mrb[0].mxu0 %v682
      %v938 = vpop.f32.mrb[0].mxu0
      %v939 = vadd.f32 %v657, %v938
      %v940 = vpop.f32.mrb[0].mxu0
      %v941 = vpop.f32.mrb[0].mxu0
      %v942 = vadd.f32 %v666, %v941
      %v943 = vpop.f32.mrb[0].mxu0
      %944 = vdwg.mxu0
      %v945 = vmul.f32 %v719, 0.2
      %v946 = vmul.f32 %v721, 0.2
      %v947 = vmul.f32 %v772, 0.2
      %v948 = vmul.f32 %v774, 0.2
      %v949 = vmul.f32 %v825, 0.2
      %v950 = vmul.f32 %v827, 0.2
      %v951 = vmul.f32 %v878, 0.2
      %v952 = vmul.f32 %v880, 0.2
      %v953 = vmul.f32 %v931, 0.2
      %v954 = vmul.f32 %v723, 0.2
      %v955 = vmul.f32 %v725, 0.2
      %v956 = vmul.f32 %v776, 0.2
      %v957 = vmul.f32 %v778, 0.2
      %v958 = vmul.f32 %v829, 0.2
      %v959 = vmul.f32 %v831, 0.2
      %v960 = vmul.f32 %v882, 0.2
      %v961 = vmul.f32 %v884, 0.2
      %v962 = vmul.f32 %v934, 0.2
      %v963 = vmul.f32 %v729, 0.2
      %v964 = vmul.f32 %v731, 0.2
      %v965 = vmul.f32 %v782, 0.2
      %v966 = vmul.f32 %v784, 0.2
      %v967 = vmul.f32 %v835, 0.2
      %v968 = vmul.f32 %v837, 0.2
      %v969 = vmul.f32 %v888, 0.2
      %v970 = vmul.f32 %v890, 0.2
      %v971 = vmul.f32 %v939, 0.2
      %v972 = vmul.f32 %v733, 0.2
      %v973 = vmul.f32 %v735, 0.2
      %v974 = vmul.f32 %v786, 0.2
      %v975 = vmul.f32 %v788, 0.2
      %v976 = vmul.f32 %v839, 0.2
      %v977 = vmul.f32 %v841, 0.2
      %v978 = vmul.f32 %v892, 0.2
      %v979 = vmul.f32 %v894, 0.2
      %v980 = vmul.f32 %v942, 0.2
      %v981 = vmax.f32 %v719, %v945
      %v982 = vmax.f32 %v721, %v946
      %v983 = vmax.f32 %v772, %v947
      %v984 = vmax.f32 %v774, %v948
      %v985 = vmax.f32 %v825, %v949
      %v986 = vmax.f32 %v827, %v950
      %v987 = vmax.f32 %v878, %v951
      %v988 = vmax.f32 %v880, %v952
      %v989 = vmax.f32 %v931, %v953
      %v990 = vmax.f32 %v723, %v954
      %v991 = vmax.f32 %v725, %v955
      %v992 = vmax.f32 %v776, %v956
      %v993 = vmax.f32 %v778, %v957
      %v994 = vmax.f32 %v829, %v958
      %v995 = vmax.f32 %v831, %v959
      %v996 = vmax.f32 %v882, %v960
      %v997 = vmax.f32 %v884, %v961
      %v998 = vmax.f32 %v934, %v962
      %v999 = vmax.f32 %v729, %v963
      %v1000 = vmax.f32 %v731, %v964
      %v1001 = vmax.f32 %v782, %v965
      %v1002 = vmax.f32 %v784, %v966
      %v1003 = vmax.f32 %v835, %v967
      %v1004 = vmax.f32 %v837, %v968
      %v1005 = vmax.f32 %v888, %v969
      %v1006 = vmax.f32 %v890, %v970
      %v1007 = vmax.f32 %v939, %v971
      %v1008 = vmax.f32 %v733, %v972
      %v1009 = vmax.f32 %v735, %v973
      %v1010 = vmax.f32 %v786, %v974
      %v1011 = vmax.f32 %v788, %v975
      %v1012 = vmax.f32 %v839, %v976
      %v1013 = vmax.f32 %v841, %v977
      %v1014 = vmax.f32 %v892, %v978
      %v1015 = vmax.f32 %v894, %v979
      %v1016 = vmax.f32 %v942, %v980
      %1017 = vst [vmem:[%s214] sm:$0xff] %v981
      %1018 = vst [vmem:[%s214 + $0x8] sm:$0xff] %v982
      %1019 = vst [vmem:[%s214 + $0x10] sm:$0xff] %v983
      %1020 = vst [vmem:[%s214 + $0x18] sm:$0xff] %v984
      %1021 = vst [vmem:[%s214 + $0x20] sm:$0xff] %v985
      %1022 = vst [vmem:[%s214 + $0x28] sm:$0xff] %v986
      %1023 = vst [vmem:[%s214 + $0x30] sm:$0xff] %v987
      %1024 = vst [vmem:[%s214 + $0x38] sm:$0xff] %v988
      %1025 = vst.msk [vmem:[%s214 + $0x40] sm:$0xff] %vm281, %v989
      %1026 = vst [vmem:[%s214 + $0x48] sm:$0xff] %v990
      %1027 = vst [vmem:[%s214 + $0x50] sm:$0xff] %v991
      %1028 = vst [vmem:[%s214 + $0x58] sm:$0xff] %v992
      %1029 = vst [vmem:[%s214 + $0x60] sm:$0xff] %v993
      %1030 = vst [vmem:[%s214 + $0x68] sm:$0xff] %v994
      %1031 = vst [vmem:[%s214 + $0x70] sm:$0xff] %v995
      %1032 = vst [vmem:[%s214 + $0x78] sm:$0xff] %v996
      %1033 = vst [vmem:[%s214 + $0x80] sm:$0xff] %v997
      %1034 = vst.msk [vmem:[%s214 + $0x88] sm:$0xff] %vm281, %v998
      %1035 = vst [vmem:[%s214 + $0x90] sm:$0xff] %v999
      %1036 = vst [vmem:[%s214 + $0x98] sm:$0xff] %v1000
      %1037 = vst [vmem:[%s214 + $0xa0] sm:$0xff] %v1001
      %1038 = vst [vmem:[%s214 + $0xa8] sm:$0xff] %v1002
      %1039 = vst [vmem:[%s214 + $0xb0] sm:$0xff] %v1003
      %1040 = vst [vmem:[%s214 + $0xb8] sm:$0xff] %v1004
      %1041 = vst [vmem:[%s214 + $0xc0] sm:$0xff] %v1005
      %1042 = vst [vmem:[%s214 + $0xc8] sm:$0xff] %v1006
      %1043 = vst.msk [vmem:[%s214 + $0xd0] sm:$0xff] %vm281, %v1007
      %1044 = vst [vmem:[%s214 + $0xd8] sm:$0xff] %v1008
      %1045 = vst [vmem:[%s214 + $0xe0] sm:$0xff] %v1009
      %1046 = vst [vmem:[%s214 + $0xe8] sm:$0xff] %v1010
      %1047 = vst [vmem:[%s214 + $0xf0] sm:$0xff] %v1011
      %1048 = vst [vmem:[%s214 + $0xf8] sm:$0xff] %v1012
      %1049 = vst [vmem:[%s214 + $0x100] sm:$0xff] %v1013
      %1050 = vst [vmem:[%s214 + $0x108] sm:$0xff] %v1014
      %1051 = vst [vmem:[%s214 + $0x110] sm:$0xff] %v1015
      %1052 = vst.msk [vmem:[%s214 + $0x118] sm:$0xff] %vm281, %v1016
      %s1053 = smul.u32 9, %s18
      %p1054 = scmp.lt.s32.totalorder %s19, 1
      %s1055 = scalar_select %p1054, %s19, 1
      %p1056 = scmp.lt.s32.totalorder %s1053, 8
      %s1057 = scalar_select %p1056, %s1053, 8
      %s1058 = smul.addr %s1055, 36
      %s1059 = sadd.s32 %s1057, %s1058
      %s1060 = smul.addr %s1059, 8
      %s1061 = scalar_lea.vmem %s3, %s1060
      // Predicated region
      $region33: #{conv_upsample.3} parent=31 // pred_check
        %p1062 = pneg %p119
      $region34: #{conv_upsample.3} parent=31 // pred_check_branch
        %1064 = sbr.rel (%p1062) target = $region36
      $region35: #{conv_upsample.3} parent=31 // pred_region
        %s1065 = smul.u32 9, %s18
      $region36: #{conv_upsample.3} parent=31 // pred_fallthru
        _
    $region32: #{conv_upsample.3} parent=5 // pred_fallthru
      _
    %p1066 = scmp.le.s32.totalorder 2, %s9
    // Predicated region
    $region37: #{conv_upsample.3} parent=5 // pred_check
      %p1067 = pneg %p1066
    $region38: #{conv_upsample.3} parent=5 // pred_check_branch
      %1069 = sbr.rel (%p1067) target = $region40
    $region39: #{conv_upsample.3} parent=5 // pred_region
      %s1070 = ssub.s32 %s9, 2
      // Predicated region
      $region41: #{conv_upsample.3} parent=39 // pred_check
        %p1071 = pneg %p125
      $region42: #{conv_upsample.3} parent=39 // pred_check_branch
        %1073 = sbr.rel (%p1071) target = $region44
      $region43: #{conv_upsample.3} parent=39 // pred_region
        %s1074 = smul.u32 9, %s20
        %p1075 = scmp.lt.s32.totalorder %s21, 1
        %s1076 = scalar_select %p1075, %s21, 1
        %p1077 = scmp.lt.s32.totalorder %s1074, 8
        %s1078 = scalar_select %p1077, %s1074, 8
        %s1079 = smul.addr %s1076, 36
        %s1080 = sadd.s32 %s1078, %s1079
        %s1081 = smul.addr %s1080, 8
        %s1082 = scalar_lea.vmem %s3, %s1081
      $region44: #{conv_upsample.3} parent=39 // pred_fallthru
        _
    $region40: #{conv_upsample.3} parent=5 // pred_fallthru
      _
  $region6: #{conv_upsample.3} parent=0 // loop_footer
    %s13 = sadd.s32 1, %s9
  $region7: #{conv_upsample.3} parent=0 // loop_footer_branch
    %8 = sbr.rel target = $region3
  $region8: #{conv_upsample.3} parent=0 // loop_exit
    _

</llo_original>
